<compile_context>
chip_gen: v5e
topology: v5e:2x2
jax: 0.10.0
libtpu: 0.0.40
codegen_flags: <defaults>
</compile_context>

<pallas_src>
import functools
import math

import jax
import jax.numpy as jnp
from jax.experimental import pallas as pl
from jax.experimental.pallas import tpu as pltpu


# ---------------------------------------------------------------------------
# In-kernel math helpers
# ---------------------------------------------------------------------------
_SQRT_HALF = 0.7071067811865476


def _erf(x):
    # Abramowitz & Stegun 7.1.26 rational approximation (|err| < 1.5e-7),
    # built from mul/add/exp/reciprocal/where so it always lowers in Mosaic.
    # The divide is pushed onto the (otherwise idle) EUP slot.
    a1, a2, a3, a4, a5 = (0.254829592, -0.284496736, 1.421413741,
                          -1.453152027, 1.061405429)
    p = 0.3275911
    ax = jnp.abs(x)
    t = pl.reciprocal(1.0 + p * ax, approx=True)
    poly = ((((a5 * t + a4) * t + a3) * t + a2) * t + a1) * t
    y = 1.0 - poly * jnp.exp(-ax * ax)
    return jnp.where(x < 0, -y, y)


def _gelu_exact(x):
    # PyTorch nn.GELU default (erf form): 0.5 * x * (1 + erf(x / sqrt(2)))
    return 0.5 * x * (1.0 + _erf(x * _SQRT_HALF))


# ---------------------------------------------------------------------------
# Kernel
# ---------------------------------------------------------------------------
def _mlp_kernel(x_ref, w1_ref, b1_ref, w2_ref, b2_ref, o_ref):
    # x_ref:  (TM, Cin)   w1_ref: (Cin, H)   b1_ref: (1, H)
    # w2_ref: (H, Cout)   b2_ref: (1, Cout)  o_ref:  (TM, Cout)
    #
    # Feed the MXU in the operands' native dtype (full-rate bf16 path for bf16
    # callers); accumulate in f32.
    h = jnp.dot(x_ref[...], w1_ref[...], preferred_element_type=jnp.float32)
    h = h + b1_ref[...].astype(jnp.float32)
    h = _gelu_exact(h)                        # nn.GELU;  Dropout(p=0.0) == id
    # Cast the hidden activation back to the weight dtype for fc2 (no-op for
    # f32 weights, halves fc2's MXU passes + intermediate footprint for bf16).
    y = jnp.dot(h.astype(w2_ref.dtype), w2_ref[...],
                preferred_element_type=jnp.float32)
    y = y + b2_ref[...].astype(jnp.float32)
    # TODO(synk): for Cout < 128 a lane-dense repack of the output
    # ((tm, Cout) -> (tm*Cout//128, 128)) would avoid masked vst.msk stores;
    # kept as-is pending a bundle-dump check of the relayout cost.
    o_ref[...] = y.astype(o_ref.dtype)


# ---------------------------------------------------------------------------
# Tiling / wrapper
# ---------------------------------------------------------------------------
def _pick_block_m(m, cin, hidden, cout, in_isz, out_isz):
    """Largest row tile within a VMEM tile budget, preferring an even grid
    (balanced megacore sharding on v7x) and >= 2 grid steps."""
    tile_budget = 12 << 20  # bytes for pipelined x/out tiles + f32 hidden slab

    def fits(tm):
        return (tm * hidden * 4                    # f32 hidden activation
                + 2 * tm * cin * in_isz            # double-buffered x tile
                + 2 * tm * cout * out_isz          # double-buffered out tile
                ) <= tile_budget

    m8 = ((m + 7) // 8) * 8                        # sublane-aligned ceiling
    cands = [t for t in (4096, 2048, 1024, 512, 256, 128, 64, 32, 16, 8)
             if t <= m8 and fits(t)]
    if not cands:
        # TODO(synk): for very large hidden dims a (tm, H) slab may not fit;
        # an H-chunked variant (extra 'arbitrary' grid axis + f32 accumulator)
        # would be needed.  Fall back to the smallest tile.
        cands = [8]

    def score(tm):
        g = pl.cdiv(m, tm)
        return (g % 2 == 0, g >= 2, tm)

    return max(cands, key=score)


@functools.partial(jax.jit, static_argnames=("block_m", "single_buffer_weights"))
def _mlp_impl(x, w1, b1, w2, b2, block_m, single_buffer_weights):
    cin = x.shape[-1]
    hidden = w1.shape[1]
    cout = w2.shape[1]
    lead = x.shape[:-1]
    m = math.prod(lead)

    x2 = x.reshape(m, cin)                   # contiguous view, no HBM shuffle
    b1r = b1.reshape(1, hidden)
    b2r = b2.reshape(1, cout)

    in_isz = x.dtype.itemsize
    out_isz = x.dtype.itemsize
    w_isz = w1.dtype.itemsize

    if block_m is None:
        tm = _pick_block_m(m, cin, hidden, cout, in_isz, out_isz)
    else:
        tm = max(8, ((int(block_m) + 7) // 8) * 8)   # sublane-aligned tile

    grid_m = pl.cdiv(m, tm)
    m_pad = grid_m * tm
    if m_pad != m:                           # tail rows: pad, slice off later
        x2 = jnp.pad(x2, ((0, m_pad - m), (0, 0)))

    # Resident operands (constant index_map) only need one VMEM buffer.
    resident = ({"pipeline_mode": pl.Buffered(buffer_count=1)}
                if single_buffer_weights else {})

    weight_bytes = (cin * hidden + hidden * cout + hidden + cout) * w_isz
    tile_bytes = (2 * tm * cin * in_isz + 2 * tm * cout * out_isz
                  + 2 * tm * hidden * 4)
    vmem_limit = int(min(
        max(weight_bytes * (1 if single_buffer_weights else 2)
            + tile_bytes + (8 << 20), 32 << 20),
        64 << 20))

    cost = pl.CostEstimate(
        flops=2 * m_pad * (cin * hidden + hidden * cout),
        transcendentals=m_pad * hidden,
        bytes_accessed=(m_pad * cin * in_isz + m_pad * cout * out_isz
                        + weight_bytes))

    out2 = pl.pallas_call(
        _mlp_kernel,
        grid=(grid_m,),
        in_specs=[
            pl.BlockSpec((tm, cin), lambda i: (i, 0)),                 # x rows
            pl.BlockSpec((cin, hidden), lambda i: (0, 0), **resident),  # W1
            pl.BlockSpec((1, hidden), lambda i: (0, 0), **resident),    # b1
            pl.BlockSpec((hidden, cout), lambda i: (0, 0), **resident),  # W2
            pl.BlockSpec((1, cout), lambda i: (0, 0), **resident),      # b2
        ],
        out_specs=pl.BlockSpec((tm, cout), lambda i: (i, 0)),
        out_shape=jax.ShapeDtypeStruct((m_pad, cout), x.dtype),
        compiler_params=pltpu.CompilerParams(
            dimension_semantics=("parallel",),
            vmem_limit_bytes=vmem_limit),
        cost_estimate=cost,
    )(x2, w1, b1r, w2, b2r)

    if m_pad != m:
        out2 = out2[:m]
    return out2.reshape(*lead, cout)


def mlp(x, w1, b1, w2, b2, block_m=None):
    """Fused Mlp forward: y = fc2(GELU(fc1(x)));  Dropout(p=0.0) == identity.

    x : (..., Cin)    w1: (Cin, H)   b1: (H,)    w2: (H, Cout)   b2: (Cout,)
    Returns (..., Cout) in x.dtype.
    """
    try:
        # Preferred path: single-buffered resident weights.
        return _mlp_impl(x, w1, b1, w2, b2, block_m, True)
    except Exception:
        # Fallback if this Pallas build rejects Buffered(1): default buffering.
        return _mlp_impl(x, w1, b1, w2, b2, block_m, False)


def _reference(x, w1, b1, w2, b2):
    h = jnp.dot(x, w1, precision=jax.lax.Precision.HIGHEST) + b1
    h = jax.nn.gelu(h, approximate=False)           # exact (erf) GELU
    return jnp.dot(h, w2, precision=jax.lax.Precision.HIGHEST) + b2


if __name__ == "__main__":
    key = jax.random.PRNGKey(0)
    kx, k1, kb1, k2, kb2 = jax.random.split(key, 5)

    # Mlp(in_features=32, hidden_features=64) on a (batch=2, seq=128, C=32)
    # token tensor.
    B, N, C_IN, C_HID, C_OUT = 2, 128, 32, 64, 32
    x = jax.random.normal(kx, (B, N, C_IN), dtype=jnp.float32)
    # nn.Linear-style init scale (~U(-1/sqrt(fan_in), 1/sqrt(fan_in)))
    w1 = jax.random.uniform(k1, (C_IN, C_HID), jnp.float32, -1.0, 1.0) / jnp.sqrt(C_IN)
    b1 = jax.random.uniform(kb1, (C_HID,), jnp.float32, -1.0, 1.0) / jnp.sqrt(C_IN)
    w2 = jax.random.uniform(k2, (C_HID, C_OUT), jnp.float32, -1.0, 1.0) / jnp.sqrt(C_HID)
    b2 = jax.random.uniform(kb2, (C_OUT,), jnp.float32, -1.0, 1.0) / jnp.sqrt(C_HID)

    out = jax.block_until_ready(mlp(x, w1, b1, w2, b2))
    ref = _reference(x, w1, b1, w2, b2)

    assert out.shape == (B, N, C_OUT)
    max_err = float(jnp.max(jnp.abs(out - ref)))
    assert jnp.allclose(out, ref, atol=2e-3, rtol=2e-3), max_err

    # TODO(synk): nn.Dropout with drop > 0.0 (training mode) is not implemented;
    # the module default drop=0.0 makes it an identity, which is what runs here.
    print("KERNEL_OK")
</pallas_src>

<mosaic_0001>
module attributes {stable_mosaic.version = 11 : i64} {
  func.func @_mlp_kernel(%arg0: i32, %arg1: memref<128x32xf32, #tpu.memory_space<vmem>>, %arg2: memref<32x64xf32, #tpu.memory_space<vmem>>, %arg3: memref<1x64xf32, #tpu.memory_space<vmem>>, %arg4: memref<64x32xf32, #tpu.memory_space<vmem>>, %arg5: memref<1x32xf32, #tpu.memory_space<vmem>>, %arg6: memref<128x32xf32, #tpu.memory_space<vmem>>) attributes {dimension_semantics = [#tpu.dimension_semantics<parallel>], iteration_bounds = array<i64: 2>, scalar_prefetch = 0 : i64, scratch_operands = 0 : i64, tpu.core_type = #tpu.core_type<tc>, window_params = [{transform_indices = @transform_0, window_bounds = array<i64: 128, 32>}, {pipeline_mode = #tpu.pipeline_mode<synchronous>, transform_indices = @transform_1, window_bounds = array<i64: 32, 64>}, {pipeline_mode = #tpu.pipeline_mode<synchronous>, transform_indices = @transform_2, window_bounds = array<i64: 1, 64>}, {pipeline_mode = #tpu.pipeline_mode<synchronous>, transform_indices = @transform_3, window_bounds = array<i64: 64, 32>}, {pipeline_mode = #tpu.pipeline_mode<synchronous>, transform_indices = @transform_4, window_bounds = array<i64: 1, 32>}, {transform_indices = @transform_5, window_bounds = array<i64: 128, 32>}]} {
    %c0 = arith.constant 0 : index
    %c0_0 = arith.constant 0 : index
    %0 = vector.load %arg1[%c0, %c0_0] : memref<128x32xf32, #tpu.memory_space<vmem>>, vector<128x32xf32>
    %c0_1 = arith.constant 0 : index
    %c0_2 = arith.constant 0 : index
    %1 = vector.load %arg2[%c0_1, %c0_2] : memref<32x64xf32, #tpu.memory_space<vmem>>, vector<32x64xf32>
    %cst = arith.constant dense<0.000000e+00> : vector<128x64xf32>
    %2 = tpu.matmul %0, %1, %cst {dimension_numbers = #tpu.dot_dimension_numbers<[1], [0], [0], [1], [0, 0, 1, 1], [], []>} : vector<128x32xf32>, vector<32x64xf32>, vector<128x64xf32> -> vector<128x64xf32>
    %c0_3 = arith.constant 0 : index
    %c0_4 = arith.constant 0 : index
    %3 = vector.load %arg3[%c0_3, %c0_4] : memref<1x64xf32, #tpu.memory_space<vmem>>, vector<1x64xf32>
    %4 = vector.broadcast %3 : vector<1x64xf32> to vector<128x64xf32>
    %5 = arith.addf %2, %4 : vector<128x64xf32>
    %cst_5 = arith.constant 5.000000e-01 : f32
    %6 = vector.broadcast %cst_5 : f32 to vector<128x64xf32>
    %7 = arith.mulf %6, %5 : vector<128x64xf32>
    %cst_6 = arith.constant 0.707106769 : f32
    %8 = vector.broadcast %cst_6 : f32 to vector<128x64xf32>
    %9 = arith.mulf %5, %8 : vector<128x64xf32>
    %10 = math.absf %9 : vector<128x64xf32>
    %cst_7 = arith.constant 0.327591091 : f32
    %11 = vector.broadcast %cst_7 : f32 to vector<128x64xf32>
    %12 = arith.mulf %11, %10 : vector<128x64xf32>
    %cst_8 = arith.constant 1.000000e+00 : f32
    %13 = vector.broadcast %cst_8 : f32 to vector<128x64xf32>
    %14 = arith.addf %13, %12 : vector<128x64xf32>
    %15 = tpu.reciprocal %14 {approx = true} : vector<128x64xf32> -> vector<128x64xf32>
    %cst_9 = arith.constant 1.06140542 : f32
    %16 = vector.broadcast %cst_9 : f32 to vector<128x64xf32>
    %17 = arith.mulf %16, %15 : vector<128x64xf32>
    %cst_10 = arith.constant -1.45315206 : f32
    %18 = vector.broadcast %cst_10 : f32 to vector<128x64xf32>
    %19 = arith.addf %17, %18 : vector<128x64xf32>
    %20 = arith.mulf %19, %15 : vector<128x64xf32>
    %cst_11 = arith.constant 1.42141378 : f32
    %21 = vector.broadcast %cst_11 : f32 to vector<128x64xf32>
    %22 = arith.addf %20, %21 : vector<128x64xf32>
    %23 = arith.mulf %22, %15 : vector<128x64xf32>
    %cst_12 = arith.constant -0.284496725 : f32
    %24 = vector.broadcast %cst_12 : f32 to vector<128x64xf32>
    %25 = arith.addf %23, %24 : vector<128x64xf32>
    %26 = arith.mulf %25, %15 : vector<128x64xf32>
    %cst_13 = arith.constant 0.254829586 : f32
    %27 = vector.broadcast %cst_13 : f32 to vector<128x64xf32>
    %28 = arith.addf %26, %27 : vector<128x64xf32>
    %29 = arith.mulf %28, %15 : vector<128x64xf32>
    %cst_14 = arith.constant 0.000000e+00 : f32
    %30 = vector.broadcast %cst_14 : f32 to vector<128x64xf32>
    %31 = arith.subf %30, %10 : vector<128x64xf32>
    %32 = arith.mulf %31, %10 : vector<128x64xf32>
    %33 = math.exp %32 : vector<128x64xf32>
    %34 = arith.mulf %29, %33 : vector<128x64xf32>
    %cst_15 = arith.constant 1.000000e+00 : f32
    %35 = vector.broadcast %cst_15 : f32 to vector<128x64xf32>
    %36 = arith.subf %35, %34 : vector<128x64xf32>
    %cst_16 = arith.constant 0.000000e+00 : f32
    %37 = vector.broadcast %cst_16 : f32 to vector<128x64xf32>
    %38 = arith.cmpf olt, %9, %37 : vector<128x64xf32>
    %cst_17 = arith.constant 0.000000e+00 : f32
    %39 = vector.broadcast %cst_17 : f32 to vector<128x64xf32>
    %40 = arith.subf %39, %36 : vector<128x64xf32>
    %41 = arith.select %38, %40, %36 : vector<128x64xi1>, vector<128x64xf32>
    %cst_18 = arith.constant 1.000000e+00 : f32
    %42 = vector.broadcast %cst_18 : f32 to vector<128x64xf32>
    %43 = arith.addf %42, %41 : vector<128x64xf32>
    %44 = arith.mulf %7, %43 : vector<128x64xf32>
    %c0_19 = arith.constant 0 : index
    %c0_20 = arith.constant 0 : index
    %45 = vector.load %arg4[%c0_19, %c0_20] : memref<64x32xf32, #tpu.memory_space<vmem>>, vector<64x32xf32>
    %cst_21 = arith.constant dense<0.000000e+00> : vector<128x32xf32>
    %46 = tpu.matmul %44, %45, %cst_21 {dimension_numbers = #tpu.dot_dimension_numbers<[1], [0], [0], [1], [0, 0, 1, 1], [], []>} : vector<128x64xf32>, vector<64x32xf32>, vector<128x32xf32> -> vector<128x32xf32>
    %c0_22 = arith.constant 0 : index
    %c0_23 = arith.constant 0 : index
    %47 = vector.load %arg5[%c0_22, %c0_23] : memref<1x32xf32, #tpu.memory_space<vmem>>, vector<1x32xf32>
    %48 = vector.broadcast %47 : vector<1x32xf32> to vector<128x32xf32>
    %49 = arith.addf %46, %48 : vector<128x32xf32>
    %c0_24 = arith.constant 0 : index
    %c0_25 = arith.constant 0 : index
    %50 = vector.load %arg6[%c0_24, %c0_25] : memref<128x32xf32, #tpu.memory_space<vmem>>, vector<128x32xf32>
    tpu.vector_store %arg6[%c0_24, %c0_25], %49 {strides = array<i32>} : memref<128x32xf32, #tpu.memory_space<vmem>>, vector<128x32xf32>,
    return
  }
  func.func @transform_0(%arg0: i32) -> (i32, i32) {
    %c0_i32 = arith.constant 0 : i32
    %c0_i32_0 = arith.constant 0 : i32
    return %arg0, %c0_i32 : i32, i32
  }
  func.func @transform_1(%arg0: i32) -> (i32, i32) {
    %c0_i32 = arith.constant 0 : i32
    %c0_i32_0 = arith.constant 0 : i32
    %c0_i32_1 = arith.constant 0 : i32
    return %c0_i32, %c0_i32_0 : i32, i32
  }
  func.func @transform_2(%arg0: i32) -> (i32, i32) {
    %c0_i32 = arith.constant 0 : i32
    %c0_i32_0 = arith.constant 0 : i32
    %c0_i32_1 = arith.constant 0 : i32
    return %c0_i32, %c0_i32_0 : i32, i32
  }
  func.func @transform_3(%arg0: i32) -> (i32, i32) {
    %c0_i32 = arith.constant 0 : i32
    %c0_i32_0 = arith.constant 0 : i32
    %c0_i32_1 = arith.constant 0 : i32
    return %c0_i32, %c0_i32_0 : i32, i32
  }
  func.func @transform_4(%arg0: i32) -> (i32, i32) {
    %c0_i32 = arith.constant 0 : i32
    %c0_i32_0 = arith.constant 0 : i32
    %c0_i32_1 = arith.constant 0 : i32
    return %c0_i32, %c0_i32_0 : i32, i32
  }
  func.func @transform_5(%arg0: i32) -> (i32, i32) {
    %c0_i32 = arith.constant 0 : i32
    %c0_i32_0 = arith.constant 0 : i32
    return %arg0, %c0_i32 : i32, i32
  }
}

module attributes {stable_mosaic.version = 11 : i64} {
  func.func @_mlp_kernel(%arg0: i32, %arg1: memref<128x32xf32, #tpu.memory_space<vmem>>, %arg2: memref<32x64xf32, #tpu.memory_space<vmem>>, %arg3: memref<1x64xf32, #tpu.memory_space<vmem>>, %arg4: memref<64x32xf32, #tpu.memory_space<vmem>>, %arg5: memref<1x32xf32, #tpu.memory_space<vmem>>, %arg6: memref<128x32xf32, #tpu.memory_space<vmem>>) attributes {dimension_semantics = [#tpu.dimension_semantics<parallel>], iteration_bounds = array<i64: 2>, scalar_prefetch = 0 : i64, scratch_operands = 0 : i64, tpu.core_type = #tpu.core_type<tc>, window_params = [{transform_indices = @transform_0, window_bounds = array<i64: 128, 32>}, {pipeline_mode = #tpu.pipeline_mode<synchronous>, transform_indices = @transform_1, window_bounds = array<i64: 32, 64>}, {pipeline_mode = #tpu.pipeline_mode<synchronous>, transform_indices = @transform_2, window_bounds = array<i64: 1, 64>}, {pipeline_mode = #tpu.pipeline_mode<synchronous>, transform_indices = @transform_3, window_bounds = array<i64: 64, 32>}, {pipeline_mode = #tpu.pipeline_mode<synchronous>, transform_indices = @transform_4, window_bounds = array<i64: 1, 32>}, {transform_indices = @transform_5, window_bounds = array<i64: 128, 32>}]} {
    %c0 = arith.constant 0 : index
    %c0_0 = arith.constant 0 : index
    %0 = vector.load %arg1[%c0, %c0_0] : memref<128x32xf32, #tpu.memory_space<vmem>>, vector<128x32xf32>
    %c0_1 = arith.constant 0 : index
    %c0_2 = arith.constant 0 : index
    %1 = vector.load %arg2[%c0_1, %c0_2] : memref<32x64xf32, #tpu.memory_space<vmem>>, vector<32x64xf32>
    %cst = arith.constant dense<0.000000e+00> : vector<128x64xf32>
    %2 = tpu.matmul %0, %1, %cst {dimension_numbers = #tpu.dot_dimension_numbers<[1], [0], [0], [1], [0, 0, 1, 1], [], []>} : vector<128x32xf32>, vector<32x64xf32>, vector<128x64xf32> -> vector<128x64xf32>
    %c0_3 = arith.constant 0 : index
    %c0_4 = arith.constant 0 : index
    %3 = vector.load %arg3[%c0_3, %c0_4] : memref<1x64xf32, #tpu.memory_space<vmem>>, vector<1x64xf32>
    %4 = vector.broadcast %3 : vector<1x64xf32> to vector<128x64xf32>
    %5 = arith.addf %2, %4 : vector<128x64xf32>
    %cst_5 = arith.constant 5.000000e-01 : f32
    %6 = vector.broadcast %cst_5 : f32 to vector<128x64xf32>
    %7 = arith.mulf %6, %5 : vector<128x64xf32>
    %cst_6 = arith.constant 0.707106769 : f32
    %8 = vector.broadcast %cst_6 : f32 to vector<128x64xf32>
    %9 = arith.mulf %5, %8 : vector<128x64xf32>
    %10 = math.absf %9 : vector<128x64xf32>
    %cst_7 = arith.constant 0.327591091 : f32
    %11 = vector.broadcast %cst_7 : f32 to vector<128x64xf32>
    %12 = arith.mulf %11, %10 : vector<128x64xf32>
    %cst_8 = arith.constant 1.000000e+00 : f32
    %13 = vector.broadcast %cst_8 : f32 to vector<128x64xf32>
    %14 = arith.addf %13, %12 : vector<128x64xf32>
    %15 = tpu.reciprocal %14 {approx = true} : vector<128x64xf32> -> vector<128x64xf32>
    %cst_9 = arith.constant 1.06140542 : f32
    %16 = vector.broadcast %cst_9 : f32 to vector<128x64xf32>
    %17 = arith.mulf %16, %15 : vector<128x64xf32>
    %cst_10 = arith.constant -1.45315206 : f32
    %18 = vector.broadcast %cst_10 : f32 to vector<128x64xf32>
    %19 = arith.addf %17, %18 : vector<128x64xf32>
    %20 = arith.mulf %19, %15 : vector<128x64xf32>
    %cst_11 = arith.constant 1.42141378 : f32
    %21 = vector.broadcast %cst_11 : f32 to vector<128x64xf32>
    %22 = arith.addf %20, %21 : vector<128x64xf32>
    %23 = arith.mulf %22, %15 : vector<128x64xf32>
    %cst_12 = arith.constant -0.284496725 : f32
    %24 = vector.broadcast %cst_12 : f32 to vector<128x64xf32>
    %25 = arith.addf %23, %24 : vector<128x64xf32>
    %26 = arith.mulf %25, %15 : vector<128x64xf32>
    %cst_13 = arith.constant 0.254829586 : f32
    %27 = vector.broadcast %cst_13 : f32 to vector<128x64xf32>
    %28 = arith.addf %26, %27 : vector<128x64xf32>
    %29 = arith.mulf %28, %15 : vector<128x64xf32>
    %cst_14 = arith.constant 0.000000e+00 : f32
    %30 = vector.broadcast %cst_14 : f32 to vector<128x64xf32>
    %31 = arith.subf %30, %10 : vector<128x64xf32>
    %32 = arith.mulf %31, %10 : vector<128x64xf32>
    %33 = math.exp %32 : vector<128x64xf32>
    %34 = arith.mulf %29, %33 : vector<128x64xf32>
    %cst_15 = arith.constant 1.000000e+00 : f32
    %35 = vector.broadcast %cst_15 : f32 to vector<128x64xf32>
    %36 = arith.subf %35, %34 : vector<128x64xf32>
    %cst_16 = arith.constant 0.000000e+00 : f32
    %37 = vector.broadcast %cst_16 : f32 to vector<128x64xf32>
    %38 = arith.cmpf olt, %9, %37 : vector<128x64xf32>
    %cst_17 = arith.constant 0.000000e+00 : f32
    %39 = vector.broadcast %cst_17 : f32 to vector<128x64xf32>
    %40 = arith.subf %39, %36 : vector<128x64xf32>
    %41 = arith.select %38, %40, %36 : vector<128x64xi1>, vector<128x64xf32>
    %cst_18 = arith.constant 1.000000e+00 : f32
    %42 = vector.broadcast %cst_18 : f32 to vector<128x64xf32>
    %43 = arith.addf %42, %41 : vector<128x64xf32>
    %44 = arith.mulf %7, %43 : vector<128x64xf32>
    %c0_19 = arith.constant 0 : index
    %c0_20 = arith.constant 0 : index
    %45 = vector.load %arg4[%c0_19, %c0_20] : memref<64x32xf32, #tpu.memory_space<vmem>>, vector<64x32xf32>
    %cst_21 = arith.constant dense<0.000000e+00> : vector<128x32xf32>
    %46 = tpu.matmul %44, %45, %cst_21 {dimension_numbers = #tpu.dot_dimension_numbers<[1], [0], [0], [1], [0, 0, 1, 1], [], []>} : vector<128x64xf32>, vector<64x32xf32>, vector<128x32xf32> -> vector<128x32xf32>
    %c0_22 = arith.constant 0 : index
    %c0_23 = arith.constant 0 : index
    %47 = vector.load %arg5[%c0_22, %c0_23] : memref<1x32xf32, #tpu.memory_space<vmem>>, vector<1x32xf32>
    %48 = vector.broadcast %47 : vector<1x32xf32> to vector<128x32xf32>
    %49 = arith.addf %46, %48 : vector<128x32xf32>
    %c0_24 = arith.constant 0 : index
    %c0_25 = arith.constant 0 : index
    %50 = vector.load %arg6[%c0_24, %c0_25] : memref<128x32xf32, #tpu.memory_space<vmem>>, vector<128x32xf32>
    tpu.vector_store %arg6[%c0_24, %c0_25], %49 {strides = array<i32>} : memref<128x32xf32, #tpu.memory_space<vmem>>, vector<128x32xf32>,
    return
  }
  func.func @transform_0(%arg0: i32) -> (i32, i32) {
    %c0_i32 = arith.constant 0 : i32
    %c0_i32_0 = arith.constant 0 : i32
    return %arg0, %c0_i32 : i32, i32
  }
  func.func @transform_1(%arg0: i32) -> (i32, i32) {
    %c0_i32 = arith.constant 0 : i32
    %c0_i32_0 = arith.constant 0 : i32
    %c0_i32_1 = arith.constant 0 : i32
    return %c0_i32, %c0_i32_0 : i32, i32
  }
  func.func @transform_2(%arg0: i32) -> (i32, i32) {
    %c0_i32 = arith.constant 0 : i32
    %c0_i32_0 = arith.constant 0 : i32
    %c0_i32_1 = arith.constant 0 : i32
    return %c0_i32, %c0_i32_0 : i32, i32
  }
  func.func @transform_3(%arg0: i32) -> (i32, i32) {
    %c0_i32 = arith.constant 0 : i32
    %c0_i32_0 = arith.constant 0 : i32
    %c0_i32_1 = arith.constant 0 : i32
    return %c0_i32, %c0_i32_0 : i32, i32
  }
  func.func @transform_4(%arg0: i32) -> (i32, i32) {
    %c0_i32 = arith.constant 0 : i32
    %c0_i32_0 = arith.constant 0 : i32
    %c0_i32_1 = arith.constant 0 : i32
    return %c0_i32, %c0_i32_0 : i32, i32
  }
  func.func @transform_5(%arg0: i32) -> (i32, i32) {
    %c0_i32 = arith.constant 0 : i32
    %c0_i32_0 = arith.constant 0 : i32
    return %arg0, %c0_i32 : i32, i32
  }
}

</mosaic_0001>

<llo_original>
// kernel: _mlp_impl.1
$region0: #{_mlp_impl.1}
  #allocation0 [shape = 'u32[]', space=smem, size = 0x4, offset = 0x4, fixed_abs, tag = 'smem constant byte address 0x4 - core index']
  #allocation1 [shape = 'u32[72,128]{1,0:T(1,128)}', space=vmem, size = 0x9000, scoped, tag = 'internal scratch']
  %s0 = inlined_call_operand.vmem [shape: f32[256,32], index: 0, kind: input, shape index: {}]
  %s1 = inlined_call_operand.vmem [shape: f32[32,64], index: 1, kind: input, shape index: {}]
  %s2 = inlined_call_operand.vmem [shape: f32[1,64], index: 2, kind: input, shape index: {}]
  %s3 = inlined_call_operand.vmem [shape: f32[64,32], index: 3, kind: input, shape index: {}]
  %s4 = inlined_call_operand.vmem [shape: f32[1,32], index: 4, kind: input, shape index: {}]
  %s5 = inlined_call_operand.vmem [shape: f32[256,32], index: 5, kind: output, shape index: {}]
  %s6 = sld [smem:[#allocation0]]
  $region53: #{_mlp_impl.1} parent=0
    _
  %s8 = ssub.s32 1, %s6
  %s9 = scalar_select 0, %s8, %s6
  loop: start=0, step=1, limit=4
  $region2: #{_mlp_impl.1} parent=0 // loop_pre_header
    _
  $region3: #{_mlp_impl.1} parent=0 // loop_header
    %s11 = sphi 0, %s15
    %p12 = scmp.ge.s32.totalorder %s11, 4
    %s21 = sphi 0, %s23
    %s24 = sphi 0, %s21
    %s25 = sphi 0, %s24
    %s41 = sphi 0, %s25
    %s45 = sphi 0, %s45
    %s47 = sphi 0, %s45
    %s48 = sphi 0, %s47
    %s62 = sphi 0, %s48
    %s66 = sphi 0, %s66
    %s68 = sphi 0, %s66
    %s69 = sphi 0, %s68
    %s83 = sphi 0, %s69
    %s87 = sphi 0, %s87
    %s89 = sphi 0, %s87
    %s90 = sphi 0, %s89
    %s104 = sphi 0, %s90
    %s108 = sphi 0, %s108
    %s110 = sphi 0, %s108
    %s111 = sphi 0, %s110
    %s125 = sphi 0, %s111
    %s131 = sphi 0, %s133
    %s134 = sphi 0, %s131
    %s135 = sphi 0, %s134
    %s151 = sphi 0, %s135
  $region4: #{_mlp_impl.1} parent=0 // loop_header_branch
    %14 = sbr.rel (%p12) target = $region8
  $region5: #{_mlp_impl.1} parent=0 // loop_body
    %s16 = ssub.s32 %s11, 1
    %s17 = ssub.s32 %s11, 2
    %s18 = sadd.s32 %s11, 1
    %s19 = ssub.s32 %s11, %s18
    %p20 = scmp.eq.s32.totalorder %s19, 0
    %s22 = sadd.s32 %s21, 1
    %s23 = scalar_select %p20, %s21, %s22
    %p26 = pneg %p20
    %p27 = scmp.eq.s32.totalorder %s11, 1
    %p28 = por %p26, %p27
    %p29 = scmp.ne.s32.totalorder %s21, %s24
    %p30 = scmp.eq.s32.totalorder %s11, 0
    %p31 = por %p29, %p30
    %p32 = scmp.ne.s32.totalorder %s21, %s24
    %p33 = scmp.eq.s32.totalorder %s16, 1
    %p34 = por %p32, %p33
    %p35 = scmp.ne.s32.totalorder %s24, %s25
    %p36 = scmp.eq.s32.totalorder %s16, 0
    %p37 = por %p35, %p36
    %p38 = scmp.ne.s32.totalorder %s24, %s25
    %p39 = scmp.eq.s32.totalorder %s17, 1
    %p40 = por %p38, %p39
    %p42 = scmp.ne.s32.totalorder %s25, %s41
    %p43 = scmp.eq.s32.totalorder %s17, 0
    %p44 = por %p42, %p43
    %s46 = sadd.s32 %s45, 1
    %p49 = scmp.eq.s32.totalorder %s11, 1
    %p50 = scmp.ne.s32.totalorder %s45, %s47
    %p51 = scmp.eq.s32.totalorder %s11, 0
    %p52 = por %p50, %p51
    %p53 = scmp.ne.s32.totalorder %s45, %s47
    %p54 = scmp.eq.s32.totalorder %s16, 1
    %p55 = por %p53, %p54
    %p56 = scmp.ne.s32.totalorder %s47, %s48
    %p57 = scmp.eq.s32.totalorder %s16, 0
    %p58 = por %p56, %p57
    %p59 = scmp.ne.s32.totalorder %s47, %s48
    %p60 = scmp.eq.s32.totalorder %s17, 1
    %p61 = por %p59, %p60
    %p63 = scmp.ne.s32.totalorder %s48, %s62
    %p64 = scmp.eq.s32.totalorder %s17, 0
    %p65 = por %p63, %p64
    %s67 = sadd.s32 %s66, 1
    %p70 = scmp.eq.s32.totalorder %s11, 1
    %p71 = scmp.ne.s32.totalorder %s66, %s68
    %p72 = scmp.eq.s32.totalorder %s11, 0
    %p73 = por %p71, %p72
    %p74 = scmp.ne.s32.totalorder %s66, %s68
    %p75 = scmp.eq.s32.totalorder %s16, 1
    %p76 = por %p74, %p75
    %p77 = scmp.ne.s32.totalorder %s68, %s69
    %p78 = scmp.eq.s32.totalorder %s16, 0
    %p79 = por %p77, %p78
    %p80 = scmp.ne.s32.totalorder %s68, %s69
    %p81 = scmp.eq.s32.totalorder %s17, 1
    %p82 = por %p80, %p81
    %p84 = scmp.ne.s32.totalorder %s69, %s83
    %p85 = scmp.eq.s32.totalorder %s17, 0
    %p86 = por %p84, %p85
    %s88 = sadd.s32 %s87, 1
    %p91 = scmp.eq.s32.totalorder %s11, 1
    %p92 = scmp.ne.s32.totalorder %s87, %s89
    %p93 = scmp.eq.s32.totalorder %s11, 0
    %p94 = por %p92, %p93
    %p95 = scmp.ne.s32.totalorder %s87, %s89
    %p96 = scmp.eq.s32.totalorder %s16, 1
    %p97 = por %p95, %p96
    %p98 = scmp.ne.s32.totalorder %s89, %s90
    %p99 = scmp.eq.s32.totalorder %s16, 0
    %p100 = por %p98, %p99
    %p101 = scmp.ne.s32.totalorder %s89, %s90
    %p102 = scmp.eq.s32.totalorder %s17, 1
    %p103 = por %p101, %p102
    %p105 = scmp.ne.s32.totalorder %s90, %s104
    %p106 = scmp.eq.s32.totalorder %s17, 0
    %p107 = por %p105, %p106
    %s109 = sadd.s32 %s108, 1
    %p112 = scmp.eq.s32.totalorder %s11, 1
    %p113 = scmp.ne.s32.totalorder %s108, %s110
    %p114 = scmp.eq.s32.totalorder %s11, 0
    %p115 = por %p113, %p114
    %p116 = scmp.ne.s32.totalorder %s108, %s110
    %p117 = scmp.eq.s32.totalorder %s16, 1
    %p118 = por %p116, %p117
    %p119 = scmp.ne.s32.totalorder %s110, %s111
    %p120 = scmp.eq.s32.totalorder %s16, 0
    %p121 = por %p119, %p120
    %p122 = scmp.ne.s32.totalorder %s110, %s111
    %p123 = scmp.eq.s32.totalorder %s17, 1
    %p124 = por %p122, %p123
    %p126 = scmp.ne.s32.totalorder %s111, %s125
    %p127 = scmp.eq.s32.totalorder %s17, 0
    %p128 = por %p126, %p127
    %s129 = ssub.s32 %s11, %s18
    %p130 = scmp.eq.s32.totalorder %s129, 0
    %s132 = sadd.s32 %s131, 1
    %s133 = scalar_select %p130, %s131, %s132
    %p136 = pneg %p130
    %p137 = scmp.eq.s32.totalorder %s11, 1
    %p138 = por %p136, %p137
    %p139 = scmp.ne.s32.totalorder %s131, %s134
    %p140 = scmp.eq.s32.totalorder %s11, 0
    %p141 = por %p139, %p140
    %p142 = scmp.ne.s32.totalorder %s131, %s134
    %p143 = scmp.eq.s32.totalorder %s16, 1
    %p144 = por %p142, %p143
    %p145 = scmp.ne.s32.totalorder %s134, %s135
    %p146 = scmp.eq.s32.totalorder %s16, 0
    %p147 = por %p145, %p146
    %p148 = scmp.ne.s32.totalorder %s134, %s135
    %p149 = scmp.eq.s32.totalorder %s17, 1
    %p150 = por %p148, %p149
    %p152 = scmp.ne.s32.totalorder %s135, %s151
    %p153 = scmp.eq.s32.totalorder %s17, 0
    %p154 = por %p152, %p153
    %p155 = scmp.le.s32.totalorder 1, %s11
    %p156 = scmp.lt.s32.totalorder %s11, 3
    %p157 = pnand %p155, %p156
    %p158 = pneg %p157
    // Predicated region
    $region9: #{_mlp_impl.1} parent=5 // pred_check
      _
    $region10: #{_mlp_impl.1} parent=5 // pred_check_branch
      %160 = sbr.rel (%p157) target = $region12
    $region11: #{_mlp_impl.1} parent=5 // pred_region
      %s161 = ssub.s32 %s11, 1
      // Predicated region
      $region13: #{_mlp_impl.1} parent=11 // pred_check
        %p162 = pneg %p58
      $region14: #{_mlp_impl.1} parent=11 // pred_check_branch
        %164 = sbr.rel (%p162) target = $region16
      $region15: #{_mlp_impl.1} parent=11 // pred_region
        _
      $region16: #{_mlp_impl.1} parent=11 // pred_fallthru
        _
      // Predicated region
      $region17: #{_mlp_impl.1} parent=11 // pred_check
        %p165 = pneg %p79
      $region18: #{_mlp_impl.1} parent=11 // pred_check_branch
        %167 = sbr.rel (%p165) target = $region20
      $region19: #{_mlp_impl.1} parent=11 // pred_region
        _
      $region20: #{_mlp_impl.1} parent=11 // pred_fallthru
        _
      // Predicated region
      $region21: #{_mlp_impl.1} parent=11 // pred_check
        %p168 = pneg %p100
      $region22: #{_mlp_impl.1} parent=11 // pred_check_branch
        %170 = sbr.rel (%p168) target = $region24
      $region23: #{_mlp_impl.1} parent=11 // pred_region
        _
      $region24: #{_mlp_impl.1} parent=11 // pred_fallthru
        _
      // Predicated region
      $region25: #{_mlp_impl.1} parent=11 // pred_check
        %p171 = pneg %p121
      $region26: #{_mlp_impl.1} parent=11 // pred_check_branch
        %173 = sbr.rel (%p171) target = $region28
      $region27: #{_mlp_impl.1} parent=11 // pred_region
        _
      $region28: #{_mlp_impl.1} parent=11 // pred_fallthru
        _
    $region12: #{_mlp_impl.1} parent=5 // pred_fallthru
      _
    %p174 = scmp.lt.s32.totalorder %s11, 2
    // Predicated region
    $region29: #{_mlp_impl.1} parent=5 // pred_check
      %p175 = pneg %p174
    $region30: #{_mlp_impl.1} parent=5 // pred_check_branch
      %177 = sbr.rel (%p175) target = $region32
    $region31: #{_mlp_impl.1} parent=5 // pred_region
      // Predicated region
      $region33: #{_mlp_impl.1} parent=31 // pred_check
        %p178 = pneg %p31
      $region34: #{_mlp_impl.1} parent=31 // pred_check_branch
        %180 = sbr.rel (%p178) target = $region36
      $region35: #{_mlp_impl.1} parent=31 // pred_region
        %s181 = smul.u32 16, %s11
        %p182 = scmp.lt.s32.totalorder %s181, 31
        %s183 = scalar_select %p182, %s181, 31
        %s184 = smul.addr %s183, 8
        %s185 = scalar_lea.vmem %s0, %s184
        %s186 = smul.u32 16, %s11
      $region36: #{_mlp_impl.1} parent=31 // pred_fallthru
        _
    $region32: #{_mlp_impl.1} parent=5 // pred_fallthru
      _
    %p187 = scmp.le.s32.totalorder 1, %s11
    %p188 = scmp.lt.s32.totalorder %s11, 3
    %p189 = pnand %p187, %p188
    %p190 = pneg %p189
    // Predicated region
    $region37: #{_mlp_impl.1} parent=5 // pred_check
      _
    $region38: #{_mlp_impl.1} parent=5 // pred_check_branch
      %192 = sbr.rel (%p189) target = $region40
    $region39: #{_mlp_impl.1} parent=5 // pred_region
      %s193 = ssub.s32 %s11, 1
      %s194 = smul.u32 16, %s16
      %p195 = scmp.lt.s32.totalorder %s194, 31
      %s196 = scalar_select %p195, %s194, 31
      %s197 = smul.addr %s196, 8
      %s198 = scalar_lea.vmem %s0, %s197
      %p199 = pneg %p37
      %p200 = pneg %p34
      %p201 = pneg %p58
      %p202 = pneg %p55
      %p203 = pneg %p79
      %p204 = pneg %p76
      %p205 = pneg %p100
      %p206 = pneg %p97
      %p207 = pneg %p121
      %p208 = pneg %p118
      %p209 = pneg %p147
      %p210 = pneg %p144
      %s211 = smul.u32 16, %s16
      %p212 = scmp.lt.s32.totalorder %s211, 31
      %s213 = scalar_select %p212, %s211, 31
      %s214 = smul.addr %s213, 8
      %s215 = scalar_lea.vmem %s5, %s214
      %s216 = smul.u32 16, %s16
      %p217 = scmp.lt.s32.totalorder %s216, 31
      %s218 = scalar_select %p217, %s216, 31
      %s219 = smul.addr %s218, 8
      %s220 = scalar_lea.vmem %s0, %s219
      %s221 = smul.u32 16, %s16
      %s222 = smul.u32 16, %s16
      %p223 = scmp.lt.s32.totalorder %s222, 31
      %s224 = scalar_select %p223, %s222, 31
      %s225 = smul.addr %s224, 8
      %s226 = scalar_lea.vmem %s5, %s225
      %s227 = smul.u32 16, %s16
      %v228 = vld [vmem:[%s220] sm:$0xff]
      %v229 = vld [vmem:[%s220 + $0x8] sm:$0xff]
      %v230 = vld [vmem:[%s220 + $0x10] sm:$0xff]
      %v231 = vld [vmem:[%s220 + $0x18] sm:$0xff]
      %v232 = vld [vmem:[%s220 + $0x20] sm:$0xff]
      %v233 = vld [vmem:[%s220 + $0x28] sm:$0xff]
      %v234 = vld [vmem:[%s220 + $0x30] sm:$0xff]
      %v235 = vld [vmem:[%s220 + $0x38] sm:$0xff]
      %v236 = vld [vmem:[%s220 + $0x40] sm:$0xff]
      %v237 = vld [vmem:[%s220 + $0x48] sm:$0xff]
      %v238 = vld [vmem:[%s220 + $0x50] sm:$0xff]
      %v239 = vld [vmem:[%s220 + $0x58] sm:$0xff]
      %v240 = vld [vmem:[%s220 + $0x60] sm:$0xff]
      %v241 = vld [vmem:[%s220 + $0x68] sm:$0xff]
      %v242 = vld [vmem:[%s220 + $0x70] sm:$0xff]
      %v243 = vld [vmem:[%s220 + $0x78] sm:$0xff]
      %v244 = vld [vmem:[%s1] sm:$0xff]
      %v245 = vld [vmem:[%s1 + $0x8] sm:$0xff]
      %v246 = vld [vmem:[%s1 + $0x10] sm:$0xff]
      %v247 = vld [vmem:[%s1 + $0x18] sm:$0xff]
      %v248 = vld [vmem:[%s2] sm:$0x1]
      %v250 = vperm.slane %v248, 0
      %vm252 = vcmask 261120
      %v254 = vsel %vm252, %v228, 0
      %v257 = vsel %vm252, %v229, 0
      %v260 = vsel %vm252, %v230, 0
      %v263 = vsel %vm252, %v231, 0
      %v266 = vsel %vm252, %v232, 0
      %v269 = vsel %vm252, %v233, 0
      %v272 = vsel %vm252, %v234, 0
      %v275 = vsel %vm252, %v235, 0
      %v278 = vsel %vm252, %v236, 0
      %v281 = vsel %vm252, %v237, 0
      %v284 = vsel %vm252, %v238, 0
      %v287 = vsel %vm252, %v239, 0
      %v290 = vsel %vm252, %v240, 0
      %v293 = vsel %vm252, %v241, 0
      %v296 = vsel %vm252, %v242, 0
      %v299 = vsel %vm252, %v243, 0
      %301 = vmatpush.msra.mxu0 0.0
      %302 = vmatpush.msra.mxu0 0.0
      %303 = vmatpush.msra.mxu0 0.0
      %304 = vmatpush.msra.mxu0 0.0
      %305 = vmatpush.msra.mxu0 0.0
      %306 = vmatpush.msra.mxu0 0.0
      %307 = vmatpush.msra.mxu0 0.0
      %308 = vmatpush.msra.mxu0 0.0
      %309 = vmatpush.msra.mxu0 0.0
      %310 = vmatpush.msra.mxu0 0.0
      %311 = vmatpush.msra.mxu0 0.0
      %312 = vmatpush.msra.mxu0 0.0
      %313 = vmatpush.msra.mxu0 %v247
      %314 = vmatpush.msra.mxu0 %v246
      %315 = vmatpush.msra.mxu0 %v245
      %316 = vmatpush.msra.mxu0 %v244
      %317 = vmatmul.f32.gmra.mxu0 %v254
      %v318 = vpop.f32.mrf.mxu0
      %v319 = vadd.f32 %v250, %v318
      %320 = vmatmul.f32.gmra.mxu0 %v257
      %v321 = vpop.f32.mrf.mxu0
      %v322 = vadd.f32 %v250, %v321
      %323 = vmatmul.f32.gmra.mxu0 %v260
      %v324 = vpop.f32.mrf.mxu0
      %v325 = vadd.f32 %v250, %v324
      %326 = vmatmul.f32.gmra.mxu0 %v263
      %v327 = vpop.f32.mrf.mxu0
      %v328 = vadd.f32 %v250, %v327
      %329 = vmatmul.f32.gmra.mxu0 %v266
      %v330 = vpop.f32.mrf.mxu0
      %v331 = vadd.f32 %v250, %v330
      %332 = vmatmul.f32.gmra.mxu0 %v269
      %v333 = vpop.f32.mrf.mxu0
      %v334 = vadd.f32 %v250, %v333
      %335 = vmatmul.f32.gmra.mxu0 %v272
      %v336 = vpop.f32.mrf.mxu0
      %v337 = vadd.f32 %v250, %v336
      %338 = vmatmul.f32.gmra.mxu0 %v275
      %v339 = vpop.f32.mrf.mxu0
      %v340 = vadd.f32 %v250, %v339
      %341 = vmatmul.f32.gmra.mxu0 %v278
      %v342 = vpop.f32.mrf.mxu0
      %v343 = vadd.f32 %v250, %v342
      %344 = vmatmul.f32.gmra.mxu0 %v281
      %v345 = vpop.f32.mrf.mxu0
      %v346 = vadd.f32 %v250, %v345
      %347 = vmatmul.f32.gmra.mxu0 %v284
      %v348 = vpop.f32.mrf.mxu0
      %v349 = vadd.f32 %v250, %v348
      %350 = vmatmul.f32.gmra.mxu0 %v287
      %v351 = vpop.f32.mrf.mxu0
      %v352 = vadd.f32 %v250, %v351
      %353 = vmatmul.f32.gmra.mxu0 %v290
      %v354 = vpop.f32.mrf.mxu0
      %v355 = vadd.f32 %v250, %v354
      %356 = vmatmul.f32.gmra.mxu0 %v293
      %v357 = vpop.f32.mrf.mxu0
      %v358 = vadd.f32 %v250, %v357
      %359 = vmatmul.f32.gmra.mxu0 %v296
      %v360 = vpop.f32.mrf.mxu0
      %v361 = vadd.f32 %v250, %v360
      %362 = vmatmul.f32.gmra.mxu0 %v299
      %v363 = vpop.f32.mrf.mxu0
      %v364 = vadd.f32 %v250, %v363
      %365 = vdwg.mxu0
      %v366 = vmul.f32 %v319, 0.5
      %v367 = vmul.f32 %v322, 0.5
      %v368 = vmul.f32 %v325, 0.5
      %v369 = vmul.f32 %v328, 0.5
      %v370 = vmul.f32 %v331, 0.5
      %v371 = vmul.f32 %v334, 0.5
      %v372 = vmul.f32 %v337, 0.5
      %v373 = vmul.f32 %v340, 0.5
      %v374 = vmul.f32 %v343, 0.5
      %v375 = vmul.f32 %v346, 0.5
      %v376 = vmul.f32 %v349, 0.5
      %v377 = vmul.f32 %v352, 0.5
      %v378 = vmul.f32 %v355, 0.5
      %v379 = vmul.f32 %v358, 0.5
      %v380 = vmul.f32 %v361, 0.5
      %v381 = vmul.f32 %v364, 0.5
      %v382 = vmul.f32 %v319, 0.70710677
      %v383 = vmul.f32 %v322, 0.70710677
      %v384 = vmul.f32 %v325, 0.70710677
      %v385 = vmul.f32 %v328, 0.70710677
      %v386 = vmul.f32 %v331, 0.70710677
      %v387 = vmul.f32 %v334, 0.70710677
      %v388 = vmul.f32 %v337, 0.70710677
      %v389 = vmul.f32 %v340, 0.70710677
      %v390 = vmul.f32 %v343, 0.70710677
      %v391 = vmul.f32 %v346, 0.70710677
      %v392 = vmul.f32 %v349, 0.70710677
      %v393 = vmul.f32 %v352, 0.70710677
      %v394 = vmul.f32 %v355, 0.70710677
      %v395 = vmul.f32 %v358, 0.70710677
      %v396 = vmul.f32 %v361, 0.70710677
      %v397 = vmul.f32 %v364, 0.70710677
      %v398 = vand.u32 2147483647, %v382
      %v399 = vand.u32 2147483647, %v383
      %v400 = vand.u32 2147483647, %v384
      %v401 = vand.u32 2147483647, %v385
      %v402 = vand.u32 2147483647, %v386
      %v403 = vand.u32 2147483647, %v387
      %v404 = vand.u32 2147483647, %v388
      %v405 = vand.u32 2147483647, %v389
      %v406 = vand.u32 2147483647, %v390
      %v407 = vand.u32 2147483647, %v391
      %v408 = vand.u32 2147483647, %v392
      %v409 = vand.u32 2147483647, %v393
      %v410 = vand.u32 2147483647, %v394
      %v411 = vand.u32 2147483647, %v395
      %v412 = vand.u32 2147483647, %v396
      %v413 = vand.u32 2147483647, %v397
      %v414 = vmul.f32 %v398, 0.3275911
      %v415 = vmul.f32 %v399, 0.3275911
      %v416 = vmul.f32 %v400, 0.3275911
      %v417 = vmul.f32 %v401, 0.3275911
      %v418 = vmul.f32 %v402, 0.3275911
      %v419 = vmul.f32 %v403, 0.3275911
      %v420 = vmul.f32 %v404, 0.3275911
      %v421 = vmul.f32 %v405, 0.3275911
      %v422 = vmul.f32 %v406, 0.3275911
      %v423 = vmul.f32 %v407, 0.3275911
      %v424 = vmul.f32 %v408, 0.3275911
      %v425 = vmul.f32 %v409, 0.3275911
      %v426 = vmul.f32 %v410, 0.3275911
      %v427 = vmul.f32 %v411, 0.3275911
      %v428 = vmul.f32 %v412, 0.3275911
      %v429 = vmul.f32 %v413, 0.3275911
      %v430 = vadd.f32 %v414, 1.0
      %v431 = vadd.f32 %v415, 1.0
      %v432 = vadd.f32 %v416, 1.0
      %v433 = vadd.f32 %v417, 1.0
      %v434 = vadd.f32 %v418, 1.0
      %v435 = vadd.f32 %v419, 1.0
      %v436 = vadd.f32 %v420, 1.0
      %v437 = vadd.f32 %v421, 1.0
      %v438 = vadd.f32 %v422, 1.0
      %v439 = vadd.f32 %v423, 1.0
      %v440 = vadd.f32 %v424, 1.0
      %v441 = vadd.f32 %v425, 1.0
      %v442 = vadd.f32 %v426, 1.0
      %v443 = vadd.f32 %v427, 1.0
      %v444 = vadd.f32 %v428, 1.0
      %v445 = vadd.f32 %v429, 1.0
      %v446 = vrcp.pop %v430
      %v447 = vrcp.pop %v431
      %v448 = vrcp.pop %v432
      %v449 = vrcp.pop %v433
      %v450 = vrcp.pop %v434
      %v451 = vrcp.pop %v435
      %v452 = vrcp.pop %v436
      %v453 = vrcp.pop %v437
      %v454 = vrcp.pop %v438
      %v455 = vrcp.pop %v439
      %v456 = vrcp.pop %v440
      %v457 = vrcp.pop %v441
      %v458 = vrcp.pop %v442
      %v459 = vrcp.pop %v443
      %v460 = vrcp.pop %v444
      %v461 = vrcp.pop %v445
      %v462 = vmul.f32 %v446, 1.0614054
      %v463 = vmul.f32 %v447, 1.0614054
      %v464 = vmul.f32 %v448, 1.0614054
      %v465 = vmul.f32 %v449, 1.0614054
      %v466 = vmul.f32 %v450, 1.0614054
      %v467 = vmul.f32 %v451, 1.0614054
      %v468 = vmul.f32 %v452, 1.0614054
      %v469 = vmul.f32 %v453, 1.0614054
      %v470 = vmul.f32 %v454, 1.0614054
      %v471 = vmul.f32 %v455, 1.0614054
      %v472 = vmul.f32 %v456, 1.0614054
      %v473 = vmul.f32 %v457, 1.0614054
      %v474 = vmul.f32 %v458, 1.0614054
      %v475 = vmul.f32 %v459, 1.0614054
      %v476 = vmul.f32 %v460, 1.0614054
      %v477 = vmul.f32 %v461, 1.0614054
      %v478 = vadd.f32 %v462, -1.4531521
      %v479 = vadd.f32 %v463, -1.4531521
      %v480 = vadd.f32 %v464, -1.4531521
      %v481 = vadd.f32 %v465, -1.4531521
      %v482 = vadd.f32 %v466, -1.4531521
      %v483 = vadd.f32 %v467, -1.4531521
      %v484 = vadd.f32 %v468, -1.4531521
      %v485 = vadd.f32 %v469, -1.4531521
      %v486 = vadd.f32 %v470, -1.4531521
      %v487 = vadd.f32 %v471, -1.4531521
      %v488 = vadd.f32 %v472, -1.4531521
      %v489 = vadd.f32 %v473, -1.4531521
      %v490 = vadd.f32 %v474, -1.4531521
      %v491 = vadd.f32 %v475, -1.4531521
      %v492 = vadd.f32 %v476, -1.4531521
      %v493 = vadd.f32 %v477, -1.4531521
      %v494 = vmul.f32 %v478, %v446
      %v495 = vmul.f32 %v479, %v447
      %v496 = vmul.f32 %v480, %v448
      %v497 = vmul.f32 %v481, %v449
      %v498 = vmul.f32 %v482, %v450
      %v499 = vmul.f32 %v483, %v451
      %v500 = vmul.f32 %v484, %v452
      %v501 = vmul.f32 %v485, %v453
      %v502 = vmul.f32 %v486, %v454
      %v503 = vmul.f32 %v487, %v455
      %v504 = vmul.f32 %v488, %v456
      %v505 = vmul.f32 %v489, %v457
      %v506 = vmul.f32 %v490, %v458
      %v507 = vmul.f32 %v491, %v459
      %v508 = vmul.f32 %v492, %v460
      %v509 = vmul.f32 %v493, %v461
      %v510 = vadd.f32 %v494, 1.4214138
      %v511 = vadd.f32 %v495, 1.4214138
      %v512 = vadd.f32 %v496, 1.4214138
      %v513 = vadd.f32 %v497, 1.4214138
      %v514 = vadd.f32 %v498, 1.4214138
      %v515 = vadd.f32 %v499, 1.4214138
      %v516 = vadd.f32 %v500, 1.4214138
      %v517 = vadd.f32 %v501, 1.4214138
      %v518 = vadd.f32 %v502, 1.4214138
      %v519 = vadd.f32 %v503, 1.4214138
      %v520 = vadd.f32 %v504, 1.4214138
      %v521 = vadd.f32 %v505, 1.4214138
      %v522 = vadd.f32 %v506, 1.4214138
      %v523 = vadd.f32 %v507, 1.4214138
      %v524 = vadd.f32 %v508, 1.4214138
      %v525 = vadd.f32 %v509, 1.4214138
      %v526 = vmul.f32 %v510, %v446
      %v527 = vmul.f32 %v511, %v447
      %v528 = vmul.f32 %v512, %v448
      %v529 = vmul.f32 %v513, %v449
      %v530 = vmul.f32 %v514, %v450
      %v531 = vmul.f32 %v515, %v451
      %v532 = vmul.f32 %v516, %v452
      %v533 = vmul.f32 %v517, %v453
      %v534 = vmul.f32 %v518, %v454
      %v535 = vmul.f32 %v519, %v455
      %v536 = vmul.f32 %v520, %v456
      %v537 = vmul.f32 %v521, %v457
      %v538 = vmul.f32 %v522, %v458
      %v539 = vmul.f32 %v523, %v459
      %v540 = vmul.f32 %v524, %v460
      %v541 = vmul.f32 %v525, %v461
      %v542 = vadd.f32 %v526, -0.28449672
      %v543 = vadd.f32 %v527, -0.28449672
      %v544 = vadd.f32 %v528, -0.28449672
      %v545 = vadd.f32 %v529, -0.28449672
      %v546 = vadd.f32 %v530, -0.28449672
      %v547 = vadd.f32 %v531, -0.28449672
      %v548 = vadd.f32 %v532, -0.28449672
      %v549 = vadd.f32 %v533, -0.28449672
      %v550 = vadd.f32 %v534, -0.28449672
      %v551 = vadd.f32 %v535, -0.28449672
      %v552 = vadd.f32 %v536, -0.28449672
      %v553 = vadd.f32 %v537, -0.28449672
      %v554 = vadd.f32 %v538, -0.28449672
      %v555 = vadd.f32 %v539, -0.28449672
      %v556 = vadd.f32 %v540, -0.28449672
      %v557 = vadd.f32 %v541, -0.28449672
      %v558 = vmul.f32 %v542, %v446
      %v559 = vmul.f32 %v543, %v447
      %v560 = vmul.f32 %v544, %v448
      %v561 = vmul.f32 %v545, %v449
      %v562 = vmul.f32 %v546, %v450
      %v563 = vmul.f32 %v547, %v451
      %v564 = vmul.f32 %v548, %v452
      %v565 = vmul.f32 %v549, %v453
      %v566 = vmul.f32 %v550, %v454
      %v567 = vmul.f32 %v551, %v455
      %v568 = vmul.f32 %v552, %v456
      %v569 = vmul.f32 %v553, %v457
      %v570 = vmul.f32 %v554, %v458
      %v571 = vmul.f32 %v555, %v459
      %v572 = vmul.f32 %v556, %v460
      %v573 = vmul.f32 %v557, %v461
      %v574 = vadd.f32 %v558, 0.2548296
      %v575 = vadd.f32 %v559, 0.2548296
      %v576 = vadd.f32 %v560, 0.2548296
      %v577 = vadd.f32 %v561, 0.2548296
      %v578 = vadd.f32 %v562, 0.2548296
      %v579 = vadd.f32 %v563, 0.2548296
      %v580 = vadd.f32 %v564, 0.2548296
      %v581 = vadd.f32 %v565, 0.2548296
      %v582 = vadd.f32 %v566, 0.2548296
      %v583 = vadd.f32 %v567, 0.2548296
      %v584 = vadd.f32 %v568, 0.2548296
      %v585 = vadd.f32 %v569, 0.2548296
      %v586 = vadd.f32 %v570, 0.2548296
      %v587 = vadd.f32 %v571, 0.2548296
      %v588 = vadd.f32 %v572, 0.2548296
      %v589 = vadd.f32 %v573, 0.2548296
      %v590 = vmul.f32 %v574, %v446
      %v591 = vmul.f32 %v575, %v447
      %v592 = vmul.f32 %v576, %v448
      %v593 = vmul.f32 %v577, %v449
      %v594 = vmul.f32 %v578, %v450
      %v595 = vmul.f32 %v579, %v451
      %v596 = vmul.f32 %v580, %v452
      %v597 = vmul.f32 %v581, %v453
      %v598 = vmul.f32 %v582, %v454
      %v599 = vmul.f32 %v583, %v455
      %v600 = vmul.f32 %v584, %v456
      %v601 = vmul.f32 %v585, %v457
      %v602 = vmul.f32 %v586, %v458
      %v603 = vmul.f32 %v587, %v459
      %v604 = vmul.f32 %v588, %v460
      %v605 = vmul.f32 %v589, %v461
      %v606 = vsub.f32 0.0, %v398
      %v607 = vsub.f32 0.0, %v399
      %v608 = vsub.f32 0.0, %v400
      %v609 = vsub.f32 0.0, %v401
      %v610 = vsub.f32 0.0, %v402
      %v611 = vsub.f32 0.0, %v403
      %v612 = vsub.f32 0.0, %v404
      %v613 = vsub.f32 0.0, %v405
      %v614 = vsub.f32 0.0, %v406
      %v615 = vsub.f32 0.0, %v407
      %v616 = vsub.f32 0.0, %v408
      %v617 = vsub.f32 0.0, %v409
      %v618 = vsub.f32 0.0, %v410
      %v619 = vsub.f32 0.0, %v411
      %v620 = vsub.f32 0.0, %v412
      %v621 = vsub.f32 0.0, %v413
      %v622 = vmul.f32 %v606, %v398
      %v623 = vmul.f32 %v607, %v399
      %v624 = vmul.f32 %v608, %v400
      %v625 = vmul.f32 %v609, %v401
      %v626 = vmul.f32 %v610, %v402
      %v627 = vmul.f32 %v611, %v403
      %v628 = vmul.f32 %v612, %v404
      %v629 = vmul.f32 %v613, %v405
      %v630 = vmul.f32 %v614, %v406
      %v631 = vmul.f32 %v615, %v407
      %v632 = vmul.f32 %v616, %v408
      %v633 = vmul.f32 %v617, %v409
      %v634 = vmul.f32 %v618, %v410
      %v635 = vmul.f32 %v619, %v411
      %v636 = vmul.f32 %v620, %v412
      %v637 = vmul.f32 %v621, %v413
      %v638 = vmul.f32 %v622, 1.442695
      %v639 = vpow.pop %v638
      %v640 = vmul.f32 %v623, 1.442695
      %v641 = vpow.pop %v640
      %v642 = vmul.f32 %v624, 1.442695
      %v643 = vpow.pop %v642
      %v644 = vmul.f32 %v625, 1.442695
      %v645 = vpow.pop %v644
      %v646 = vmul.f32 %v626, 1.442695
      %v647 = vpow.pop %v646
      %v648 = vmul.f32 %v627, 1.442695
      %v649 = vpow.pop %v648
      %v650 = vmul.f32 %v628, 1.442695
      %v651 = vpow.pop %v650
      %v652 = vmul.f32 %v629, 1.442695
      %v653 = vpow.pop %v652
      %v654 = vmul.f32 %v630, 1.442695
      %v655 = vpow.pop %v654
      %v656 = vmul.f32 %v631, 1.442695
      %v657 = vpow.pop %v656
      %v658 = vmul.f32 %v632, 1.442695
      %v659 = vpow.pop %v658
      %v660 = vmul.f32 %v633, 1.442695
      %v661 = vpow.pop %v660
      %v662 = vmul.f32 %v634, 1.442695
      %v663 = vpow.pop %v662
      %v664 = vmul.f32 %v635, 1.442695
      %v665 = vpow.pop %v664
      %v666 = vmul.f32 %v636, 1.442695
      %v667 = vpow.pop %v666
      %v668 = vmul.f32 %v637, 1.442695
      %v669 = vpow.pop %v668
      %v670 = vmul.f32 %v590, %v639
      %v671 = vmul.f32 %v591, %v641
      %v672 = vmul.f32 %v592, %v643
      %v673 = vmul.f32 %v593, %v645
      %v674 = vmul.f32 %v594, %v647
      %v675 = vmul.f32 %v595, %v649
      %v676 = vmul.f32 %v596, %v651
      %v677 = vmul.f32 %v597, %v653
      %v678 = vmul.f32 %v598, %v655
      %v679 = vmul.f32 %v599, %v657
      %v680 = vmul.f32 %v600, %v659
      %v681 = vmul.f32 %v601, %v661
      %v682 = vmul.f32 %v602, %v663
      %v683 = vmul.f32 %v603, %v665
      %v684 = vmul.f32 %v604, %v667
      %v685 = vmul.f32 %v605, %v669
      %v686 = vsub.f32 1.0, %v670
      %v687 = vsub.f32 1.0, %v671
      %v688 = vsub.f32 1.0, %v672
      %v689 = vsub.f32 1.0, %v673
      %v690 = vsub.f32 1.0, %v674
      %v691 = vsub.f32 1.0, %v675
      %v692 = vsub.f32 1.0, %v676
      %v693 = vsub.f32 1.0, %v677
      %v694 = vsub.f32 1.0, %v678
      %v695 = vsub.f32 1.0, %v679
      %v696 = vsub.f32 1.0, %v680
      %v697 = vsub.f32 1.0, %v681
      %v698 = vsub.f32 1.0, %v682
      %v699 = vsub.f32 1.0, %v683
      %v700 = vsub.f32 1.0, %v684
      %v701 = vsub.f32 1.0, %v685
      %vm702 = vcmp.lt.f32.partialorder %v382, 0.0
      %vm703 = vcmp.lt.f32.partialorder %v383, 0.0
      %vm704 = vcmp.lt.f32.partialorder %v384, 0.0
      %vm705 = vcmp.lt.f32.partialorder %v385, 0.0
      %vm706 = vcmp.lt.f32.partialorder %v386, 0.0
      %vm707 = vcmp.lt.f32.partialorder %v387, 0.0
      %vm708 = vcmp.lt.f32.partialorder %v388, 0.0
      %vm709 = vcmp.lt.f32.partialorder %v389, 0.0
      %vm710 = vcmp.lt.f32.partialorder %v390, 0.0
      %vm711 = vcmp.lt.f32.partialorder %v391, 0.0
      %vm712 = vcmp.lt.f32.partialorder %v392, 0.0
      %vm713 = vcmp.lt.f32.partialorder %v393, 0.0
      %vm714 = vcmp.lt.f32.partialorder %v394, 0.0
      %vm715 = vcmp.lt.f32.partialorder %v395, 0.0
      %vm716 = vcmp.lt.f32.partialorder %v396, 0.0
      %vm717 = vcmp.lt.f32.partialorder %v397, 0.0
      %v718 = vsub.f32 0.0, %v686
      %v719 = vsub.f32 0.0, %v687
      %v720 = vsub.f32 0.0, %v688
      %v721 = vsub.f32 0.0, %v689
      %v722 = vsub.f32 0.0, %v690
      %v723 = vsub.f32 0.0, %v691
      %v724 = vsub.f32 0.0, %v692
      %v725 = vsub.f32 0.0, %v693
      %v726 = vsub.f32 0.0, %v694
      %v727 = vsub.f32 0.0, %v695
      %v728 = vsub.f32 0.0, %v696
      %v729 = vsub.f32 0.0, %v697
      %v730 = vsub.f32 0.0, %v698
      %v731 = vsub.f32 0.0, %v699
      %v732 = vsub.f32 0.0, %v700
      %v733 = vsub.f32 0.0, %v701
      %v734 = vsel %vm702, %v718, %v686
      %v735 = vsel %vm703, %v719, %v687
      %v736 = vsel %vm704, %v720, %v688
      %v737 = vsel %vm705, %v721, %v689
      %v738 = vsel %vm706, %v722, %v690
      %v739 = vsel %vm707, %v723, %v691
      %v740 = vsel %vm708, %v724, %v692
      %v741 = vsel %vm709, %v725, %v693
      %v742 = vsel %vm710, %v726, %v694
      %v743 = vsel %vm711, %v727, %v695
      %v744 = vsel %vm712, %v728, %v696
      %v745 = vsel %vm713, %v729, %v697
      %v746 = vsel %vm714, %v730, %v698
      %v747 = vsel %vm715, %v731, %v699
      %v748 = vsel %vm716, %v732, %v700
      %v749 = vsel %vm717, %v733, %v701
      %v750 = vadd.f32 %v734, 1.0
      %v751 = vadd.f32 %v735, 1.0
      %v752 = vadd.f32 %v736, 1.0
      %v753 = vadd.f32 %v737, 1.0
      %v754 = vadd.f32 %v738, 1.0
      %v755 = vadd.f32 %v739, 1.0
      %v756 = vadd.f32 %v740, 1.0
      %v757 = vadd.f32 %v741, 1.0
      %v758 = vadd.f32 %v742, 1.0
      %v759 = vadd.f32 %v743, 1.0
      %v760 = vadd.f32 %v744, 1.0
      %v761 = vadd.f32 %v745, 1.0
      %v762 = vadd.f32 %v746, 1.0
      %v763 = vadd.f32 %v747, 1.0
      %v764 = vadd.f32 %v748, 1.0
      %v765 = vadd.f32 %v749, 1.0
      %v766 = vmul.f32 %v366, %v750
      %v767 = vmul.f32 %v367, %v751
      %v768 = vmul.f32 %v368, %v752
      %v769 = vmul.f32 %v369, %v753
      %v770 = vmul.f32 %v370, %v754
      %v771 = vmul.f32 %v371, %v755
      %v772 = vmul.f32 %v372, %v756
      %v773 = vmul.f32 %v373, %v757
      %v774 = vmul.f32 %v374, %v758
      %v775 = vmul.f32 %v375, %v759
      %v776 = vmul.f32 %v376, %v760
      %v777 = vmul.f32 %v377, %v761
      %v778 = vmul.f32 %v378, %v762
      %v779 = vmul.f32 %v379, %v763
      %v780 = vmul.f32 %v380, %v764
      %v781 = vmul.f32 %v381, %v765
      %v782 = vld [vmem:[%s3] sm:$0xff]
      %v783 = vld [vmem:[%s3 + $0x8] sm:$0xff]
      %v784 = vld [vmem:[%s3 + $0x10] sm:$0xff]
      %v785 = vld [vmem:[%s3 + $0x18] sm:$0xff]
      %v786 = vld [vmem:[%s3 + $0x20] sm:$0xff]
      %v787 = vld [vmem:[%s3 + $0x28] sm:$0xff]
      %v788 = vld [vmem:[%s3 + $0x30] sm:$0xff]
      %v789 = vld [vmem:[%s3 + $0x38] sm:$0xff]
      %v790 = vld [vmem:[%s4] sm:$0x1]
      %v792 = vperm.slane %v790, 0
      %vm794 = vcmask 523264
      %v796 = vsel %vm794, %v766, 0
      %v799 = vsel %vm794, %v767, 0
      %v802 = vsel %vm794, %v768, 0
      %v805 = vsel %vm794, %v769, 0
      %v808 = vsel %vm794, %v770, 0
      %v811 = vsel %vm794, %v771, 0
      %v814 = vsel %vm794, %v772, 0
      %v817 = vsel %vm794, %v773, 0
      %v820 = vsel %vm794, %v774, 0
      %v823 = vsel %vm794, %v775, 0
      %v826 = vsel %vm794, %v776, 0
      %v829 = vsel %vm794, %v777, 0
      %v832 = vsel %vm794, %v778, 0
      %v835 = vsel %vm794, %v779, 0
      %v838 = vsel %vm794, %v780, 0
      %v841 = vsel %vm794, %v781, 0
      %843 = vmatpush.msra.mxu0 0.0
      %844 = vmatpush.msra.mxu0 0.0
      %845 = vmatpush.msra.mxu0 0.0
      %846 = vmatpush.msra.mxu0 0.0
      %847 = vmatpush.msra.mxu0 0.0
      %848 = vmatpush.msra.mxu0 0.0
      %849 = vmatpush.msra.mxu0 0.0
      %850 = vmatpush.msra.mxu0 0.0
      %851 = vmatpush.msra.mxu0 %v789
      %852 = vmatpush.msra.mxu0 %v788
      %853 = vmatpush.msra.mxu0 %v787
      %854 = vmatpush.msra.mxu0 %v786
      %855 = vmatpush.msra.mxu0 %v785
      %856 = vmatpush.msra.mxu0 %v784
      %857 = vmatpush.msra.mxu0 %v783
      %858 = vmatpush.msra.mxu0 %v782
      %859 = vmatmul.f32.gmra.mxu0 %v796
      %v860 = vpop.f32.mrf.mxu0
      %v861 = vadd.f32 %v792, %v860
      %862 = vmatmul.f32.gmra.mxu0 %v799
      %v863 = vpop.f32.mrf.mxu0
      %v864 = vadd.f32 %v792, %v863
      %865 = vmatmul.f32.gmra.mxu0 %v802
      %v866 = vpop.f32.mrf.mxu0
      %v867 = vadd.f32 %v792, %v866
      %868 = vmatmul.f32.gmra.mxu0 %v805
      %v869 = vpop.f32.mrf.mxu0
      %v870 = vadd.f32 %v792, %v869
      %871 = vmatmul.f32.gmra.mxu0 %v808
      %v872 = vpop.f32.mrf.mxu0
      %v873 = vadd.f32 %v792, %v872
      %874 = vmatmul.f32.gmra.mxu0 %v811
      %v875 = vpop.f32.mrf.mxu0
      %v876 = vadd.f32 %v792, %v875
      %877 = vmatmul.f32.gmra.mxu0 %v814
      %v878 = vpop.f32.mrf.mxu0
      %v879 = vadd.f32 %v792, %v878
      %880 = vmatmul.f32.gmra.mxu0 %v817
      %v881 = vpop.f32.mrf.mxu0
      %v882 = vadd.f32 %v792, %v881
      %883 = vmatmul.f32.gmra.mxu0 %v820
      %v884 = vpop.f32.mrf.mxu0
      %v885 = vadd.f32 %v792, %v884
      %886 = vmatmul.f32.gmra.mxu0 %v823
      %v887 = vpop.f32.mrf.mxu0
      %v888 = vadd.f32 %v792, %v887
      %889 = vmatmul.f32.gmra.mxu0 %v826
      %v890 = vpop.f32.mrf.mxu0
      %v891 = vadd.f32 %v792, %v890
      %892 = vmatmul.f32.gmra.mxu0 %v829
      %v893 = vpop.f32.mrf.mxu0
      %v894 = vadd.f32 %v792, %v893
      %895 = vmatmul.f32.gmra.mxu0 %v832
      %v896 = vpop.f32.mrf.mxu0
      %v897 = vadd.f32 %v792, %v896
      %898 = vmatmul.f32.gmra.mxu0 %v835
      %v899 = vpop.f32.mrf.mxu0
      %v900 = vadd.f32 %v792, %v899
      %901 = vmatmul.f32.gmra.mxu0 %v838
      %v902 = vpop.f32.mrf.mxu0
      %v903 = vadd.f32 %v792, %v902
      %904 = vmatmul.f32.gmra.mxu0 %v841
      %v905 = vpop.f32.mrf.mxu0
      %v906 = vadd.f32 %v792, %v905
      %907 = vdwg.mxu0
      %908 = vst.msk [vmem:[%s226] sm:$0xff] %vm252, %v861
      %909 = vst.msk [vmem:[%s226 + $0x8] sm:$0xff] %vm252, %v864
      %910 = vst.msk [vmem:[%s226 + $0x10] sm:$0xff] %vm252, %v867
      %911 = vst.msk [vmem:[%s226 + $0x18] sm:$0xff] %vm252, %v870
      %912 = vst.msk [vmem:[%s226 + $0x20] sm:$0xff] %vm252, %v873
      %913 = vst.msk [vmem:[%s226 + $0x28] sm:$0xff] %vm252, %v876
      %914 = vst.msk [vmem:[%s226 + $0x30] sm:$0xff] %vm252, %v879
      %915 = vst.msk [vmem:[%s226 + $0x38] sm:$0xff] %vm252, %v882
      %916 = vst.msk [vmem:[%s226 + $0x40] sm:$0xff] %vm252, %v885
      %917 = vst.msk [vmem:[%s226 + $0x48] sm:$0xff] %vm252, %v888
      %918 = vst.msk [vmem:[%s226 + $0x50] sm:$0xff] %vm252, %v891
      %919 = vst.msk [vmem:[%s226 + $0x58] sm:$0xff] %vm252, %v894
      %920 = vst.msk [vmem:[%s226 + $0x60] sm:$0xff] %vm252, %v897
      %921 = vst.msk [vmem:[%s226 + $0x68] sm:$0xff] %vm252, %v900
      %922 = vst.msk [vmem:[%s226 + $0x70] sm:$0xff] %vm252, %v903
      %923 = vst.msk [vmem:[%s226 + $0x78] sm:$0xff] %vm252, %v906
      %s924 = smul.u32 16, %s16
      %p925 = scmp.lt.s32.totalorder %s924, 31
      %s926 = scalar_select %p925, %s924, 31
      %s927 = smul.addr %s926, 8
      %s928 = scalar_lea.vmem %s5, %s927
      // Predicated region
      $region41: #{_mlp_impl.1} parent=39 // pred_check
        %p929 = pneg %p144
      $region42: #{_mlp_impl.1} parent=39 // pred_check_branch
        %931 = sbr.rel (%p929) target = $region44
      $region43: #{_mlp_impl.1} parent=39 // pred_region
        %s932 = smul.u32 16, %s16
      $region44: #{_mlp_impl.1} parent=39 // pred_fallthru
        _
    $region40: #{_mlp_impl.1} parent=5 // pred_fallthru
      _
    %p933 = scmp.le.s32.totalorder 2, %s11
    // Predicated region
    $region45: #{_mlp_impl.1} parent=5 // pred_check
      %p934 = pneg %p933
    $region46: #{_mlp_impl.1} parent=5 // pred_check_branch
      %936 = sbr.rel (%p934) target = $region48
    $region47: #{_mlp_impl.1} parent=5 // pred_region
      %s937 = ssub.s32 %s11, 2
      // Predicated region
      $region49: #{_mlp_impl.1} parent=47 // pred_check
        %p938 = pneg %p150
      $region50: #{_mlp_impl.1} parent=47 // pred_check_branch
        %940 = sbr.rel (%p938) target = $region52
      $region51: #{_mlp_impl.1} parent=47 // pred_region
        %s941 = smul.u32 16, %s17
        %p942 = scmp.lt.s32.totalorder %s941, 31
        %s943 = scalar_select %p942, %s941, 31
        %s944 = smul.addr %s943, 8
        %s945 = scalar_lea.vmem %s5, %s944
      $region52: #{_mlp_impl.1} parent=47 // pred_fallthru
        _
    $region48: #{_mlp_impl.1} parent=5 // pred_fallthru
      _
  $region6: #{_mlp_impl.1} parent=0 // loop_footer
    %s15 = sadd.s32 1, %s11
  $region7: #{_mlp_impl.1} parent=0 // loop_footer_branch
    %10 = sbr.rel target = $region3
  $region8: #{_mlp_impl.1} parent=0 // loop_exit
    _

// kernel: _mlp_impl.1
$region0: #{_mlp_impl.1}
  #allocation0 [shape = 'u32[]', space=smem, size = 0x4, offset = 0x4, fixed_abs, tag = 'smem constant byte address 0x4 - core index']
  #allocation1 [shape = 'u32[72,128]{1,0:T(1,128)}', space=vmem, size = 0x9000, scoped, tag = 'internal scratch']
  %s0 = inlined_call_operand.vmem [shape: f32[256,32], index: 0, kind: input, shape index: {}]
  %s1 = inlined_call_operand.vmem [shape: f32[32,64], index: 1, kind: input, shape index: {}]
  %s2 = inlined_call_operand.vmem [shape: f32[1,64], index: 2, kind: input, shape index: {}]
  %s3 = inlined_call_operand.vmem [shape: f32[64,32], index: 3, kind: input, shape index: {}]
  %s4 = inlined_call_operand.vmem [shape: f32[1,32], index: 4, kind: input, shape index: {}]
  %s5 = inlined_call_operand.vmem [shape: f32[256,32], index: 5, kind: output, shape index: {}]
  %s6 = sld [smem:[#allocation0]]
  $region53: #{_mlp_impl.1} parent=0
    _
  %s8 = ssub.s32 1, %s6
  %s9 = scalar_select 0, %s8, %s6
  loop: start=0, step=1, limit=4
  $region2: #{_mlp_impl.1} parent=0 // loop_pre_header
    _
  $region3: #{_mlp_impl.1} parent=0 // loop_header
    %s11 = sphi 0, %s15
    %p12 = scmp.ge.s32.totalorder %s11, 4
    %s21 = sphi 0, %s23
    %s24 = sphi 0, %s21
    %s25 = sphi 0, %s24
    %s41 = sphi 0, %s25
    %s45 = sphi 0, %s45
    %s47 = sphi 0, %s45
    %s48 = sphi 0, %s47
    %s62 = sphi 0, %s48
    %s66 = sphi 0, %s66
    %s68 = sphi 0, %s66
    %s69 = sphi 0, %s68
    %s83 = sphi 0, %s69
    %s87 = sphi 0, %s87
    %s89 = sphi 0, %s87
    %s90 = sphi 0, %s89
    %s104 = sphi 0, %s90
    %s108 = sphi 0, %s108
    %s110 = sphi 0, %s108
    %s111 = sphi 0, %s110
    %s125 = sphi 0, %s111
    %s131 = sphi 0, %s133
    %s134 = sphi 0, %s131
    %s135 = sphi 0, %s134
    %s151 = sphi 0, %s135
  $region4: #{_mlp_impl.1} parent=0 // loop_header_branch
    %14 = sbr.rel (%p12) target = $region8
  $region5: #{_mlp_impl.1} parent=0 // loop_body
    %s16 = ssub.s32 %s11, 1
    %s17 = ssub.s32 %s11, 2
    %s18 = sadd.s32 %s11, 1
    %s19 = ssub.s32 %s11, %s18
    %p20 = scmp.eq.s32.totalorder %s19, 0
    %s22 = sadd.s32 %s21, 1
    %s23 = scalar_select %p20, %s21, %s22
    %p26 = pneg %p20
    %p27 = scmp.eq.s32.totalorder %s11, 1
    %p28 = por %p26, %p27
    %p29 = scmp.ne.s32.totalorder %s21, %s24
    %p30 = scmp.eq.s32.totalorder %s11, 0
    %p31 = por %p29, %p30
    %p32 = scmp.ne.s32.totalorder %s21, %s24
    %p33 = scmp.eq.s32.totalorder %s16, 1
    %p34 = por %p32, %p33
    %p35 = scmp.ne.s32.totalorder %s24, %s25
    %p36 = scmp.eq.s32.totalorder %s16, 0
    %p37 = por %p35, %p36
    %p38 = scmp.ne.s32.totalorder %s24, %s25
    %p39 = scmp.eq.s32.totalorder %s17, 1
    %p40 = por %p38, %p39
    %p42 = scmp.ne.s32.totalorder %s25, %s41
    %p43 = scmp.eq.s32.totalorder %s17, 0
    %p44 = por %p42, %p43
    %s46 = sadd.s32 %s45, 1
    %p49 = scmp.eq.s32.totalorder %s11, 1
    %p50 = scmp.ne.s32.totalorder %s45, %s47
    %p51 = scmp.eq.s32.totalorder %s11, 0
    %p52 = por %p50, %p51
    %p53 = scmp.ne.s32.totalorder %s45, %s47
    %p54 = scmp.eq.s32.totalorder %s16, 1
    %p55 = por %p53, %p54
    %p56 = scmp.ne.s32.totalorder %s47, %s48
    %p57 = scmp.eq.s32.totalorder %s16, 0
    %p58 = por %p56, %p57
    %p59 = scmp.ne.s32.totalorder %s47, %s48
    %p60 = scmp.eq.s32.totalorder %s17, 1
    %p61 = por %p59, %p60
    %p63 = scmp.ne.s32.totalorder %s48, %s62
    %p64 = scmp.eq.s32.totalorder %s17, 0
    %p65 = por %p63, %p64
    %s67 = sadd.s32 %s66, 1
    %p70 = scmp.eq.s32.totalorder %s11, 1
    %p71 = scmp.ne.s32.totalorder %s66, %s68
    %p72 = scmp.eq.s32.totalorder %s11, 0
    %p73 = por %p71, %p72
    %p74 = scmp.ne.s32.totalorder %s66, %s68
    %p75 = scmp.eq.s32.totalorder %s16, 1
    %p76 = por %p74, %p75
    %p77 = scmp.ne.s32.totalorder %s68, %s69
    %p78 = scmp.eq.s32.totalorder %s16, 0
    %p79 = por %p77, %p78
    %p80 = scmp.ne.s32.totalorder %s68, %s69
    %p81 = scmp.eq.s32.totalorder %s17, 1
    %p82 = por %p80, %p81
    %p84 = scmp.ne.s32.totalorder %s69, %s83
    %p85 = scmp.eq.s32.totalorder %s17, 0
    %p86 = por %p84, %p85
    %s88 = sadd.s32 %s87, 1
    %p91 = scmp.eq.s32.totalorder %s11, 1
    %p92 = scmp.ne.s32.totalorder %s87, %s89
    %p93 = scmp.eq.s32.totalorder %s11, 0
    %p94 = por %p92, %p93
    %p95 = scmp.ne.s32.totalorder %s87, %s89
    %p96 = scmp.eq.s32.totalorder %s16, 1
    %p97 = por %p95, %p96
    %p98 = scmp.ne.s32.totalorder %s89, %s90
    %p99 = scmp.eq.s32.totalorder %s16, 0
    %p100 = por %p98, %p99
    %p101 = scmp.ne.s32.totalorder %s89, %s90
    %p102 = scmp.eq.s32.totalorder %s17, 1
    %p103 = por %p101, %p102
    %p105 = scmp.ne.s32.totalorder %s90, %s104
    %p106 = scmp.eq.s32.totalorder %s17, 0
    %p107 = por %p105, %p106
    %s109 = sadd.s32 %s108, 1
    %p112 = scmp.eq.s32.totalorder %s11, 1
    %p113 = scmp.ne.s32.totalorder %s108, %s110
    %p114 = scmp.eq.s32.totalorder %s11, 0
    %p115 = por %p113, %p114
    %p116 = scmp.ne.s32.totalorder %s108, %s110
    %p117 = scmp.eq.s32.totalorder %s16, 1
    %p118 = por %p116, %p117
    %p119 = scmp.ne.s32.totalorder %s110, %s111
    %p120 = scmp.eq.s32.totalorder %s16, 0
    %p121 = por %p119, %p120
    %p122 = scmp.ne.s32.totalorder %s110, %s111
    %p123 = scmp.eq.s32.totalorder %s17, 1
    %p124 = por %p122, %p123
    %p126 = scmp.ne.s32.totalorder %s111, %s125
    %p127 = scmp.eq.s32.totalorder %s17, 0
    %p128 = por %p126, %p127
    %s129 = ssub.s32 %s11, %s18
    %p130 = scmp.eq.s32.totalorder %s129, 0
    %s132 = sadd.s32 %s131, 1
    %s133 = scalar_select %p130, %s131, %s132
    %p136 = pneg %p130
    %p137 = scmp.eq.s32.totalorder %s11, 1
    %p138 = por %p136, %p137
    %p139 = scmp.ne.s32.totalorder %s131, %s134
    %p140 = scmp.eq.s32.totalorder %s11, 0
    %p141 = por %p139, %p140
    %p142 = scmp.ne.s32.totalorder %s131, %s134
    %p143 = scmp.eq.s32.totalorder %s16, 1
    %p144 = por %p142, %p143
    %p145 = scmp.ne.s32.totalorder %s134, %s135
    %p146 = scmp.eq.s32.totalorder %s16, 0
    %p147 = por %p145, %p146
    %p148 = scmp.ne.s32.totalorder %s134, %s135
    %p149 = scmp.eq.s32.totalorder %s17, 1
    %p150 = por %p148, %p149
    %p152 = scmp.ne.s32.totalorder %s135, %s151
    %p153 = scmp.eq.s32.totalorder %s17, 0
    %p154 = por %p152, %p153
    %p155 = scmp.le.s32.totalorder 1, %s11
    %p156 = scmp.lt.s32.totalorder %s11, 3
    %p157 = pnand %p155, %p156
    %p158 = pneg %p157
    // Predicated region
    $region9: #{_mlp_impl.1} parent=5 // pred_check
      _
    $region10: #{_mlp_impl.1} parent=5 // pred_check_branch
      %160 = sbr.rel (%p157) target = $region12
    $region11: #{_mlp_impl.1} parent=5 // pred_region
      %s161 = ssub.s32 %s11, 1
      // Predicated region
      $region13: #{_mlp_impl.1} parent=11 // pred_check
        %p162 = pneg %p58
      $region14: #{_mlp_impl.1} parent=11 // pred_check_branch
        %164 = sbr.rel (%p162) target = $region16
      $region15: #{_mlp_impl.1} parent=11 // pred_region
        _
      $region16: #{_mlp_impl.1} parent=11 // pred_fallthru
        _
      // Predicated region
      $region17: #{_mlp_impl.1} parent=11 // pred_check
        %p165 = pneg %p79
      $region18: #{_mlp_impl.1} parent=11 // pred_check_branch
        %167 = sbr.rel (%p165) target = $region20
      $region19: #{_mlp_impl.1} parent=11 // pred_region
        _
      $region20: #{_mlp_impl.1} parent=11 // pred_fallthru
        _
      // Predicated region
      $region21: #{_mlp_impl.1} parent=11 // pred_check
        %p168 = pneg %p100
      $region22: #{_mlp_impl.1} parent=11 // pred_check_branch
        %170 = sbr.rel (%p168) target = $region24
      $region23: #{_mlp_impl.1} parent=11 // pred_region
        _
      $region24: #{_mlp_impl.1} parent=11 // pred_fallthru
        _
      // Predicated region
      $region25: #{_mlp_impl.1} parent=11 // pred_check
        %p171 = pneg %p121
      $region26: #{_mlp_impl.1} parent=11 // pred_check_branch
        %173 = sbr.rel (%p171) target = $region28
      $region27: #{_mlp_impl.1} parent=11 // pred_region
        _
      $region28: #{_mlp_impl.1} parent=11 // pred_fallthru
        _
    $region12: #{_mlp_impl.1} parent=5 // pred_fallthru
      _
    %p174 = scmp.lt.s32.totalorder %s11, 2
    // Predicated region
    $region29: #{_mlp_impl.1} parent=5 // pred_check
      %p175 = pneg %p174
    $region30: #{_mlp_impl.1} parent=5 // pred_check_branch
      %177 = sbr.rel (%p175) target = $region32
    $region31: #{_mlp_impl.1} parent=5 // pred_region
      // Predicated region
      $region33: #{_mlp_impl.1} parent=31 // pred_check
        %p178 = pneg %p31
      $region34: #{_mlp_impl.1} parent=31 // pred_check_branch
        %180 = sbr.rel (%p178) target = $region36
      $region35: #{_mlp_impl.1} parent=31 // pred_region
        %s181 = smul.u32 16, %s11
        %p182 = scmp.lt.s32.totalorder %s181, 31
        %s183 = scalar_select %p182, %s181, 31
        %s184 = smul.addr %s183, 8
        %s185 = scalar_lea.vmem %s0, %s184
        %s186 = smul.u32 16, %s11
      $region36: #{_mlp_impl.1} parent=31 // pred_fallthru
        _
    $region32: #{_mlp_impl.1} parent=5 // pred_fallthru
      _
    %p187 = scmp.le.s32.totalorder 1, %s11
    %p188 = scmp.lt.s32.totalorder %s11, 3
    %p189 = pnand %p187, %p188
    %p190 = pneg %p189
    // Predicated region
    $region37: #{_mlp_impl.1} parent=5 // pred_check
      _
    $region38: #{_mlp_impl.1} parent=5 // pred_check_branch
      %192 = sbr.rel (%p189) target = $region40
    $region39: #{_mlp_impl.1} parent=5 // pred_region
      %s193 = ssub.s32 %s11, 1
      %s194 = smul.u32 16, %s16
      %p195 = scmp.lt.s32.totalorder %s194, 31
      %s196 = scalar_select %p195, %s194, 31
      %s197 = smul.addr %s196, 8
      %s198 = scalar_lea.vmem %s0, %s197
      %p199 = pneg %p37
      %p200 = pneg %p34
      %p201 = pneg %p58
      %p202 = pneg %p55
      %p203 = pneg %p79
      %p204 = pneg %p76
      %p205 = pneg %p100
      %p206 = pneg %p97
      %p207 = pneg %p121
      %p208 = pneg %p118
      %p209 = pneg %p147
      %p210 = pneg %p144
      %s211 = smul.u32 16, %s16
      %p212 = scmp.lt.s32.totalorder %s211, 31
      %s213 = scalar_select %p212, %s211, 31
      %s214 = smul.addr %s213, 8
      %s215 = scalar_lea.vmem %s5, %s214
      %s216 = smul.u32 16, %s16
      %p217 = scmp.lt.s32.totalorder %s216, 31
      %s218 = scalar_select %p217, %s216, 31
      %s219 = smul.addr %s218, 8
      %s220 = scalar_lea.vmem %s0, %s219
      %s221 = smul.u32 16, %s16
      %s222 = smul.u32 16, %s16
      %p223 = scmp.lt.s32.totalorder %s222, 31
      %s224 = scalar_select %p223, %s222, 31
      %s225 = smul.addr %s224, 8
      %s226 = scalar_lea.vmem %s5, %s225
      %s227 = smul.u32 16, %s16
      %v228 = vld [vmem:[%s220] sm:$0xff]
      %v229 = vld [vmem:[%s220 + $0x8] sm:$0xff]
      %v230 = vld [vmem:[%s220 + $0x10] sm:$0xff]
      %v231 = vld [vmem:[%s220 + $0x18] sm:$0xff]
      %v232 = vld [vmem:[%s220 + $0x20] sm:$0xff]
      %v233 = vld [vmem:[%s220 + $0x28] sm:$0xff]
      %v234 = vld [vmem:[%s220 + $0x30] sm:$0xff]
      %v235 = vld [vmem:[%s220 + $0x38] sm:$0xff]
      %v236 = vld [vmem:[%s220 + $0x40] sm:$0xff]
      %v237 = vld [vmem:[%s220 + $0x48] sm:$0xff]
      %v238 = vld [vmem:[%s220 + $0x50] sm:$0xff]
      %v239 = vld [vmem:[%s220 + $0x58] sm:$0xff]
      %v240 = vld [vmem:[%s220 + $0x60] sm:$0xff]
      %v241 = vld [vmem:[%s220 + $0x68] sm:$0xff]
      %v242 = vld [vmem:[%s220 + $0x70] sm:$0xff]
      %v243 = vld [vmem:[%s220 + $0x78] sm:$0xff]
      %v244 = vld [vmem:[%s1] sm:$0xff]
      %v245 = vld [vmem:[%s1 + $0x8] sm:$0xff]
      %v246 = vld [vmem:[%s1 + $0x10] sm:$0xff]
      %v247 = vld [vmem:[%s1 + $0x18] sm:$0xff]
      %v248 = vld [vmem:[%s2] sm:$0x1]
      %v250 = vperm.slane %v248, 0
      %vm252 = vcmask 261120
      %v254 = vsel %vm252, %v228, 0
      %v257 = vsel %vm252, %v229, 0
      %v260 = vsel %vm252, %v230, 0
      %v263 = vsel %vm252, %v231, 0
      %v266 = vsel %vm252, %v232, 0
      %v269 = vsel %vm252, %v233, 0
      %v272 = vsel %vm252, %v234, 0
      %v275 = vsel %vm252, %v235, 0
      %v278 = vsel %vm252, %v236, 0
      %v281 = vsel %vm252, %v237, 0
      %v284 = vsel %vm252, %v238, 0
      %v287 = vsel %vm252, %v239, 0
      %v290 = vsel %vm252, %v240, 0
      %v293 = vsel %vm252, %v241, 0
      %v296 = vsel %vm252, %v242, 0
      %v299 = vsel %vm252, %v243, 0
      %301 = vmatpush.msra.mxu0 0.0
      %302 = vmatpush.msra.mxu0 0.0
      %303 = vmatpush.msra.mxu0 0.0
      %304 = vmatpush.msra.mxu0 0.0
      %305 = vmatpush.msra.mxu0 0.0
      %306 = vmatpush.msra.mxu0 0.0
      %307 = vmatpush.msra.mxu0 0.0
      %308 = vmatpush.msra.mxu0 0.0
      %309 = vmatpush.msra.mxu0 0.0
      %310 = vmatpush.msra.mxu0 0.0
      %311 = vmatpush.msra.mxu0 0.0
      %312 = vmatpush.msra.mxu0 0.0
      %313 = vmatpush.msra.mxu0 %v247
      %314 = vmatpush.msra.mxu0 %v246
      %315 = vmatpush.msra.mxu0 %v245
      %316 = vmatpush.msra.mxu0 %v244
      %317 = vmatmul.f32.gmra.mxu0 %v254
      %v318 = vpop.f32.mrf.mxu0
      %v319 = vadd.f32 %v250, %v318
      %320 = vmatmul.f32.gmra.mxu0 %v257
      %v321 = vpop.f32.mrf.mxu0
      %v322 = vadd.f32 %v250, %v321
      %323 = vmatmul.f32.gmra.mxu0 %v260
      %v324 = vpop.f32.mrf.mxu0
      %v325 = vadd.f32 %v250, %v324
      %326 = vmatmul.f32.gmra.mxu0 %v263
      %v327 = vpop.f32.mrf.mxu0
      %v328 = vadd.f32 %v250, %v327
      %329 = vmatmul.f32.gmra.mxu0 %v266
      %v330 = vpop.f32.mrf.mxu0
      %v331 = vadd.f32 %v250, %v330
      %332 = vmatmul.f32.gmra.mxu0 %v269
      %v333 = vpop.f32.mrf.mxu0
      %v334 = vadd.f32 %v250, %v333
      %335 = vmatmul.f32.gmra.mxu0 %v272
      %v336 = vpop.f32.mrf.mxu0
      %v337 = vadd.f32 %v250, %v336
      %338 = vmatmul.f32.gmra.mxu0 %v275
      %v339 = vpop.f32.mrf.mxu0
      %v340 = vadd.f32 %v250, %v339
      %341 = vmatmul.f32.gmra.mxu0 %v278
      %v342 = vpop.f32.mrf.mxu0
      %v343 = vadd.f32 %v250, %v342
      %344 = vmatmul.f32.gmra.mxu0 %v281
      %v345 = vpop.f32.mrf.mxu0
      %v346 = vadd.f32 %v250, %v345
      %347 = vmatmul.f32.gmra.mxu0 %v284
      %v348 = vpop.f32.mrf.mxu0
      %v349 = vadd.f32 %v250, %v348
      %350 = vmatmul.f32.gmra.mxu0 %v287
      %v351 = vpop.f32.mrf.mxu0
      %v352 = vadd.f32 %v250, %v351
      %353 = vmatmul.f32.gmra.mxu0 %v290
      %v354 = vpop.f32.mrf.mxu0
      %v355 = vadd.f32 %v250, %v354
      %356 = vmatmul.f32.gmra.mxu0 %v293
      %v357 = vpop.f32.mrf.mxu0
      %v358 = vadd.f32 %v250, %v357
      %359 = vmatmul.f32.gmra.mxu0 %v296
      %v360 = vpop.f32.mrf.mxu0
      %v361 = vadd.f32 %v250, %v360
      %362 = vmatmul.f32.gmra.mxu0 %v299
      %v363 = vpop.f32.mrf.mxu0
      %v364 = vadd.f32 %v250, %v363
      %365 = vdwg.mxu0
      %v366 = vmul.f32 %v319, 0.5
      %v367 = vmul.f32 %v322, 0.5
      %v368 = vmul.f32 %v325, 0.5
      %v369 = vmul.f32 %v328, 0.5
      %v370 = vmul.f32 %v331, 0.5
      %v371 = vmul.f32 %v334, 0.5
      %v372 = vmul.f32 %v337, 0.5
      %v373 = vmul.f32 %v340, 0.5
      %v374 = vmul.f32 %v343, 0.5
      %v375 = vmul.f32 %v346, 0.5
      %v376 = vmul.f32 %v349, 0.5
      %v377 = vmul.f32 %v352, 0.5
      %v378 = vmul.f32 %v355, 0.5
      %v379 = vmul.f32 %v358, 0.5
      %v380 = vmul.f32 %v361, 0.5
      %v381 = vmul.f32 %v364, 0.5
      %v382 = vmul.f32 %v319, 0.70710677
      %v383 = vmul.f32 %v322, 0.70710677
      %v384 = vmul.f32 %v325, 0.70710677
      %v385 = vmul.f32 %v328, 0.70710677
      %v386 = vmul.f32 %v331, 0.70710677
      %v387 = vmul.f32 %v334, 0.70710677
      %v388 = vmul.f32 %v337, 0.70710677
      %v389 = vmul.f32 %v340, 0.70710677
      %v390 = vmul.f32 %v343, 0.70710677
      %v391 = vmul.f32 %v346, 0.70710677
      %v392 = vmul.f32 %v349, 0.70710677
      %v393 = vmul.f32 %v352, 0.70710677
      %v394 = vmul.f32 %v355, 0.70710677
      %v395 = vmul.f32 %v358, 0.70710677
      %v396 = vmul.f32 %v361, 0.70710677
      %v397 = vmul.f32 %v364, 0.70710677
      %v398 = vand.u32 2147483647, %v382
      %v399 = vand.u32 2147483647, %v383
      %v400 = vand.u32 2147483647, %v384
      %v401 = vand.u32 2147483647, %v385
      %v402 = vand.u32 2147483647, %v386
      %v403 = vand.u32 2147483647, %v387
      %v404 = vand.u32 2147483647, %v388
      %v405 = vand.u32 2147483647, %v389
      %v406 = vand.u32 2147483647, %v390
      %v407 = vand.u32 2147483647, %v391
      %v408 = vand.u32 2147483647, %v392
      %v409 = vand.u32 2147483647, %v393
      %v410 = vand.u32 2147483647, %v394
      %v411 = vand.u32 2147483647, %v395
      %v412 = vand.u32 2147483647, %v396
      %v413 = vand.u32 2147483647, %v397
      %v414 = vmul.f32 %v398, 0.3275911
      %v415 = vmul.f32 %v399, 0.3275911
      %v416 = vmul.f32 %v400, 0.3275911
      %v417 = vmul.f32 %v401, 0.3275911
      %v418 = vmul.f32 %v402, 0.3275911
      %v419 = vmul.f32 %v403, 0.3275911
      %v420 = vmul.f32 %v404, 0.3275911
      %v421 = vmul.f32 %v405, 0.3275911
      %v422 = vmul.f32 %v406, 0.3275911
      %v423 = vmul.f32 %v407, 0.3275911
      %v424 = vmul.f32 %v408, 0.3275911
      %v425 = vmul.f32 %v409, 0.3275911
      %v426 = vmul.f32 %v410, 0.3275911
      %v427 = vmul.f32 %v411, 0.3275911
      %v428 = vmul.f32 %v412, 0.3275911
      %v429 = vmul.f32 %v413, 0.3275911
      %v430 = vadd.f32 %v414, 1.0
      %v431 = vadd.f32 %v415, 1.0
      %v432 = vadd.f32 %v416, 1.0
      %v433 = vadd.f32 %v417, 1.0
      %v434 = vadd.f32 %v418, 1.0
      %v435 = vadd.f32 %v419, 1.0
      %v436 = vadd.f32 %v420, 1.0
      %v437 = vadd.f32 %v421, 1.0
      %v438 = vadd.f32 %v422, 1.0
      %v439 = vadd.f32 %v423, 1.0
      %v440 = vadd.f32 %v424, 1.0
      %v441 = vadd.f32 %v425, 1.0
      %v442 = vadd.f32 %v426, 1.0
      %v443 = vadd.f32 %v427, 1.0
      %v444 = vadd.f32 %v428, 1.0
      %v445 = vadd.f32 %v429, 1.0
      %v446 = vrcp.pop %v430
      %v447 = vrcp.pop %v431
      %v448 = vrcp.pop %v432
      %v449 = vrcp.pop %v433
      %v450 = vrcp.pop %v434
      %v451 = vrcp.pop %v435
      %v452 = vrcp.pop %v436
      %v453 = vrcp.pop %v437
      %v454 = vrcp.pop %v438
      %v455 = vrcp.pop %v439
      %v456 = vrcp.pop %v440
      %v457 = vrcp.pop %v441
      %v458 = vrcp.pop %v442
      %v459 = vrcp.pop %v443
      %v460 = vrcp.pop %v444
      %v461 = vrcp.pop %v445
      %v462 = vmul.f32 %v446, 1.0614054
      %v463 = vmul.f32 %v447, 1.0614054
      %v464 = vmul.f32 %v448, 1.0614054
      %v465 = vmul.f32 %v449, 1.0614054
      %v466 = vmul.f32 %v450, 1.0614054
      %v467 = vmul.f32 %v451, 1.0614054
      %v468 = vmul.f32 %v452, 1.0614054
      %v469 = vmul.f32 %v453, 1.0614054
      %v470 = vmul.f32 %v454, 1.0614054
      %v471 = vmul.f32 %v455, 1.0614054
      %v472 = vmul.f32 %v456, 1.0614054
      %v473 = vmul.f32 %v457, 1.0614054
      %v474 = vmul.f32 %v458, 1.0614054
      %v475 = vmul.f32 %v459, 1.0614054
      %v476 = vmul.f32 %v460, 1.0614054
      %v477 = vmul.f32 %v461, 1.0614054
      %v478 = vadd.f32 %v462, -1.4531521
      %v479 = vadd.f32 %v463, -1.4531521
      %v480 = vadd.f32 %v464, -1.4531521
      %v481 = vadd.f32 %v465, -1.4531521
      %v482 = vadd.f32 %v466, -1.4531521
      %v483 = vadd.f32 %v467, -1.4531521
      %v484 = vadd.f32 %v468, -1.4531521
      %v485 = vadd.f32 %v469, -1.4531521
      %v486 = vadd.f32 %v470, -1.4531521
      %v487 = vadd.f32 %v471, -1.4531521
      %v488 = vadd.f32 %v472, -1.4531521
      %v489 = vadd.f32 %v473, -1.4531521
      %v490 = vadd.f32 %v474, -1.4531521
      %v491 = vadd.f32 %v475, -1.4531521
      %v492 = vadd.f32 %v476, -1.4531521
      %v493 = vadd.f32 %v477, -1.4531521
      %v494 = vmul.f32 %v478, %v446
      %v495 = vmul.f32 %v479, %v447
      %v496 = vmul.f32 %v480, %v448
      %v497 = vmul.f32 %v481, %v449
      %v498 = vmul.f32 %v482, %v450
      %v499 = vmul.f32 %v483, %v451
      %v500 = vmul.f32 %v484, %v452
      %v501 = vmul.f32 %v485, %v453
      %v502 = vmul.f32 %v486, %v454
      %v503 = vmul.f32 %v487, %v455
      %v504 = vmul.f32 %v488, %v456
      %v505 = vmul.f32 %v489, %v457
      %v506 = vmul.f32 %v490, %v458
      %v507 = vmul.f32 %v491, %v459
      %v508 = vmul.f32 %v492, %v460
      %v509 = vmul.f32 %v493, %v461
      %v510 = vadd.f32 %v494, 1.4214138
      %v511 = vadd.f32 %v495, 1.4214138
      %v512 = vadd.f32 %v496, 1.4214138
      %v513 = vadd.f32 %v497, 1.4214138
      %v514 = vadd.f32 %v498, 1.4214138
      %v515 = vadd.f32 %v499, 1.4214138
      %v516 = vadd.f32 %v500, 1.4214138
      %v517 = vadd.f32 %v501, 1.4214138
      %v518 = vadd.f32 %v502, 1.4214138
      %v519 = vadd.f32 %v503, 1.4214138
      %v520 = vadd.f32 %v504, 1.4214138
      %v521 = vadd.f32 %v505, 1.4214138
      %v522 = vadd.f32 %v506, 1.4214138
      %v523 = vadd.f32 %v507, 1.4214138
      %v524 = vadd.f32 %v508, 1.4214138
      %v525 = vadd.f32 %v509, 1.4214138
      %v526 = vmul.f32 %v510, %v446
      %v527 = vmul.f32 %v511, %v447
      %v528 = vmul.f32 %v512, %v448
      %v529 = vmul.f32 %v513, %v449
      %v530 = vmul.f32 %v514, %v450
      %v531 = vmul.f32 %v515, %v451
      %v532 = vmul.f32 %v516, %v452
      %v533 = vmul.f32 %v517, %v453
      %v534 = vmul.f32 %v518, %v454
      %v535 = vmul.f32 %v519, %v455
      %v536 = vmul.f32 %v520, %v456
      %v537 = vmul.f32 %v521, %v457
      %v538 = vmul.f32 %v522, %v458
      %v539 = vmul.f32 %v523, %v459
      %v540 = vmul.f32 %v524, %v460
      %v541 = vmul.f32 %v525, %v461
      %v542 = vadd.f32 %v526, -0.28449672
      %v543 = vadd.f32 %v527, -0.28449672
      %v544 = vadd.f32 %v528, -0.28449672
      %v545 = vadd.f32 %v529, -0.28449672
      %v546 = vadd.f32 %v530, -0.28449672
      %v547 = vadd.f32 %v531, -0.28449672
      %v548 = vadd.f32 %v532, -0.28449672
      %v549 = vadd.f32 %v533, -0.28449672
      %v550 = vadd.f32 %v534, -0.28449672
      %v551 = vadd.f32 %v535, -0.28449672
      %v552 = vadd.f32 %v536, -0.28449672
      %v553 = vadd.f32 %v537, -0.28449672
      %v554 = vadd.f32 %v538, -0.28449672
      %v555 = vadd.f32 %v539, -0.28449672
      %v556 = vadd.f32 %v540, -0.28449672
      %v557 = vadd.f32 %v541, -0.28449672
      %v558 = vmul.f32 %v542, %v446
      %v559 = vmul.f32 %v543, %v447
      %v560 = vmul.f32 %v544, %v448
      %v561 = vmul.f32 %v545, %v449
      %v562 = vmul.f32 %v546, %v450
      %v563 = vmul.f32 %v547, %v451
      %v564 = vmul.f32 %v548, %v452
      %v565 = vmul.f32 %v549, %v453
      %v566 = vmul.f32 %v550, %v454
      %v567 = vmul.f32 %v551, %v455
      %v568 = vmul.f32 %v552, %v456
      %v569 = vmul.f32 %v553, %v457
      %v570 = vmul.f32 %v554, %v458
      %v571 = vmul.f32 %v555, %v459
      %v572 = vmul.f32 %v556, %v460
      %v573 = vmul.f32 %v557, %v461
      %v574 = vadd.f32 %v558, 0.2548296
      %v575 = vadd.f32 %v559, 0.2548296
      %v576 = vadd.f32 %v560, 0.2548296
      %v577 = vadd.f32 %v561, 0.2548296
      %v578 = vadd.f32 %v562, 0.2548296
      %v579 = vadd.f32 %v563, 0.2548296
      %v580 = vadd.f32 %v564, 0.2548296
      %v581 = vadd.f32 %v565, 0.2548296
      %v582 = vadd.f32 %v566, 0.2548296
      %v583 = vadd.f32 %v567, 0.2548296
      %v584 = vadd.f32 %v568, 0.2548296
      %v585 = vadd.f32 %v569, 0.2548296
      %v586 = vadd.f32 %v570, 0.2548296
      %v587 = vadd.f32 %v571, 0.2548296
      %v588 = vadd.f32 %v572, 0.2548296
      %v589 = vadd.f32 %v573, 0.2548296
      %v590 = vmul.f32 %v574, %v446
      %v591 = vmul.f32 %v575, %v447
      %v592 = vmul.f32 %v576, %v448
      %v593 = vmul.f32 %v577, %v449
      %v594 = vmul.f32 %v578, %v450
      %v595 = vmul.f32 %v579, %v451
      %v596 = vmul.f32 %v580, %v452
      %v597 = vmul.f32 %v581, %v453
      %v598 = vmul.f32 %v582, %v454
      %v599 = vmul.f32 %v583, %v455
      %v600 = vmul.f32 %v584, %v456
      %v601 = vmul.f32 %v585, %v457
      %v602 = vmul.f32 %v586, %v458
      %v603 = vmul.f32 %v587, %v459
      %v604 = vmul.f32 %v588, %v460
      %v605 = vmul.f32 %v589, %v461
      %v606 = vsub.f32 0.0, %v398
      %v607 = vsub.f32 0.0, %v399
      %v608 = vsub.f32 0.0, %v400
      %v609 = vsub.f32 0.0, %v401
      %v610 = vsub.f32 0.0, %v402
      %v611 = vsub.f32 0.0, %v403
      %v612 = vsub.f32 0.0, %v404
      %v613 = vsub.f32 0.0, %v405
      %v614 = vsub.f32 0.0, %v406
      %v615 = vsub.f32 0.0, %v407
      %v616 = vsub.f32 0.0, %v408
      %v617 = vsub.f32 0.0, %v409
      %v618 = vsub.f32 0.0, %v410
      %v619 = vsub.f32 0.0, %v411
      %v620 = vsub.f32 0.0, %v412
      %v621 = vsub.f32 0.0, %v413
      %v622 = vmul.f32 %v606, %v398
      %v623 = vmul.f32 %v607, %v399
      %v624 = vmul.f32 %v608, %v400
      %v625 = vmul.f32 %v609, %v401
      %v626 = vmul.f32 %v610, %v402
      %v627 = vmul.f32 %v611, %v403
      %v628 = vmul.f32 %v612, %v404
      %v629 = vmul.f32 %v613, %v405
      %v630 = vmul.f32 %v614, %v406
      %v631 = vmul.f32 %v615, %v407
      %v632 = vmul.f32 %v616, %v408
      %v633 = vmul.f32 %v617, %v409
      %v634 = vmul.f32 %v618, %v410
      %v635 = vmul.f32 %v619, %v411
      %v636 = vmul.f32 %v620, %v412
      %v637 = vmul.f32 %v621, %v413
      %v638 = vmul.f32 %v622, 1.442695
      %v639 = vpow.pop %v638
      %v640 = vmul.f32 %v623, 1.442695
      %v641 = vpow.pop %v640
      %v642 = vmul.f32 %v624, 1.442695
      %v643 = vpow.pop %v642
      %v644 = vmul.f32 %v625, 1.442695
      %v645 = vpow.pop %v644
      %v646 = vmul.f32 %v626, 1.442695
      %v647 = vpow.pop %v646
      %v648 = vmul.f32 %v627, 1.442695
      %v649 = vpow.pop %v648
      %v650 = vmul.f32 %v628, 1.442695
      %v651 = vpow.pop %v650
      %v652 = vmul.f32 %v629, 1.442695
      %v653 = vpow.pop %v652
      %v654 = vmul.f32 %v630, 1.442695
      %v655 = vpow.pop %v654
      %v656 = vmul.f32 %v631, 1.442695
      %v657 = vpow.pop %v656
      %v658 = vmul.f32 %v632, 1.442695
      %v659 = vpow.pop %v658
      %v660 = vmul.f32 %v633, 1.442695
      %v661 = vpow.pop %v660
      %v662 = vmul.f32 %v634, 1.442695
      %v663 = vpow.pop %v662
      %v664 = vmul.f32 %v635, 1.442695
      %v665 = vpow.pop %v664
      %v666 = vmul.f32 %v636, 1.442695
      %v667 = vpow.pop %v666
      %v668 = vmul.f32 %v637, 1.442695
      %v669 = vpow.pop %v668
      %v670 = vmul.f32 %v590, %v639
      %v671 = vmul.f32 %v591, %v641
      %v672 = vmul.f32 %v592, %v643
      %v673 = vmul.f32 %v593, %v645
      %v674 = vmul.f32 %v594, %v647
      %v675 = vmul.f32 %v595, %v649
      %v676 = vmul.f32 %v596, %v651
      %v677 = vmul.f32 %v597, %v653
      %v678 = vmul.f32 %v598, %v655
      %v679 = vmul.f32 %v599, %v657
      %v680 = vmul.f32 %v600, %v659
      %v681 = vmul.f32 %v601, %v661
      %v682 = vmul.f32 %v602, %v663
      %v683 = vmul.f32 %v603, %v665
      %v684 = vmul.f32 %v604, %v667
      %v685 = vmul.f32 %v605, %v669
      %v686 = vsub.f32 1.0, %v670
      %v687 = vsub.f32 1.0, %v671
      %v688 = vsub.f32 1.0, %v672
      %v689 = vsub.f32 1.0, %v673
      %v690 = vsub.f32 1.0, %v674
      %v691 = vsub.f32 1.0, %v675
      %v692 = vsub.f32 1.0, %v676
      %v693 = vsub.f32 1.0, %v677
      %v694 = vsub.f32 1.0, %v678
      %v695 = vsub.f32 1.0, %v679
      %v696 = vsub.f32 1.0, %v680
      %v697 = vsub.f32 1.0, %v681
      %v698 = vsub.f32 1.0, %v682
      %v699 = vsub.f32 1.0, %v683
      %v700 = vsub.f32 1.0, %v684
      %v701 = vsub.f32 1.0, %v685
      %vm702 = vcmp.lt.f32.partialorder %v382, 0.0
      %vm703 = vcmp.lt.f32.partialorder %v383, 0.0
      %vm704 = vcmp.lt.f32.partialorder %v384, 0.0
      %vm705 = vcmp.lt.f32.partialorder %v385, 0.0
      %vm706 = vcmp.lt.f32.partialorder %v386, 0.0
      %vm707 = vcmp.lt.f32.partialorder %v387, 0.0
      %vm708 = vcmp.lt.f32.partialorder %v388, 0.0
      %vm709 = vcmp.lt.f32.partialorder %v389, 0.0
      %vm710 = vcmp.lt.f32.partialorder %v390, 0.0
      %vm711 = vcmp.lt.f32.partialorder %v391, 0.0
      %vm712 = vcmp.lt.f32.partialorder %v392, 0.0
      %vm713 = vcmp.lt.f32.partialorder %v393, 0.0
      %vm714 = vcmp.lt.f32.partialorder %v394, 0.0
      %vm715 = vcmp.lt.f32.partialorder %v395, 0.0
      %vm716 = vcmp.lt.f32.partialorder %v396, 0.0
      %vm717 = vcmp.lt.f32.partialorder %v397, 0.0
      %v718 = vsub.f32 0.0, %v686
      %v719 = vsub.f32 0.0, %v687
      %v720 = vsub.f32 0.0, %v688
      %v721 = vsub.f32 0.0, %v689
      %v722 = vsub.f32 0.0, %v690
      %v723 = vsub.f32 0.0, %v691
      %v724 = vsub.f32 0.0, %v692
      %v725 = vsub.f32 0.0, %v693
      %v726 = vsub.f32 0.0, %v694
      %v727 = vsub.f32 0.0, %v695
      %v728 = vsub.f32 0.0, %v696
      %v729 = vsub.f32 0.0, %v697
      %v730 = vsub.f32 0.0, %v698
      %v731 = vsub.f32 0.0, %v699
      %v732 = vsub.f32 0.0, %v700
      %v733 = vsub.f32 0.0, %v701
      %v734 = vsel %vm702, %v718, %v686
      %v735 = vsel %vm703, %v719, %v687
      %v736 = vsel %vm704, %v720, %v688
      %v737 = vsel %vm705, %v721, %v689
      %v738 = vsel %vm706, %v722, %v690
      %v739 = vsel %vm707, %v723, %v691
      %v740 = vsel %vm708, %v724, %v692
      %v741 = vsel %vm709, %v725, %v693
      %v742 = vsel %vm710, %v726, %v694
      %v743 = vsel %vm711, %v727, %v695
      %v744 = vsel %vm712, %v728, %v696
      %v745 = vsel %vm713, %v729, %v697
      %v746 = vsel %vm714, %v730, %v698
      %v747 = vsel %vm715, %v731, %v699
      %v748 = vsel %vm716, %v732, %v700
      %v749 = vsel %vm717, %v733, %v701
      %v750 = vadd.f32 %v734, 1.0
      %v751 = vadd.f32 %v735, 1.0
      %v752 = vadd.f32 %v736, 1.0
      %v753 = vadd.f32 %v737, 1.0
      %v754 = vadd.f32 %v738, 1.0
      %v755 = vadd.f32 %v739, 1.0
      %v756 = vadd.f32 %v740, 1.0
      %v757 = vadd.f32 %v741, 1.0
      %v758 = vadd.f32 %v742, 1.0
      %v759 = vadd.f32 %v743, 1.0
      %v760 = vadd.f32 %v744, 1.0
      %v761 = vadd.f32 %v745, 1.0
      %v762 = vadd.f32 %v746, 1.0
      %v763 = vadd.f32 %v747, 1.0
      %v764 = vadd.f32 %v748, 1.0
      %v765 = vadd.f32 %v749, 1.0
      %v766 = vmul.f32 %v366, %v750
      %v767 = vmul.f32 %v367, %v751
      %v768 = vmul.f32 %v368, %v752
      %v769 = vmul.f32 %v369, %v753
      %v770 = vmul.f32 %v370, %v754
      %v771 = vmul.f32 %v371, %v755
      %v772 = vmul.f32 %v372, %v756
      %v773 = vmul.f32 %v373, %v757
      %v774 = vmul.f32 %v374, %v758
      %v775 = vmul.f32 %v375, %v759
      %v776 = vmul.f32 %v376, %v760
      %v777 = vmul.f32 %v377, %v761
      %v778 = vmul.f32 %v378, %v762
      %v779 = vmul.f32 %v379, %v763
      %v780 = vmul.f32 %v380, %v764
      %v781 = vmul.f32 %v381, %v765
      %v782 = vld [vmem:[%s3] sm:$0xff]
      %v783 = vld [vmem:[%s3 + $0x8] sm:$0xff]
      %v784 = vld [vmem:[%s3 + $0x10] sm:$0xff]
      %v785 = vld [vmem:[%s3 + $0x18] sm:$0xff]
      %v786 = vld [vmem:[%s3 + $0x20] sm:$0xff]
      %v787 = vld [vmem:[%s3 + $0x28] sm:$0xff]
      %v788 = vld [vmem:[%s3 + $0x30] sm:$0xff]
      %v789 = vld [vmem:[%s3 + $0x38] sm:$0xff]
      %v790 = vld [vmem:[%s4] sm:$0x1]
      %v792 = vperm.slane %v790, 0
      %vm794 = vcmask 523264
      %v796 = vsel %vm794, %v766, 0
      %v799 = vsel %vm794, %v767, 0
      %v802 = vsel %vm794, %v768, 0
      %v805 = vsel %vm794, %v769, 0
      %v808 = vsel %vm794, %v770, 0
      %v811 = vsel %vm794, %v771, 0
      %v814 = vsel %vm794, %v772, 0
      %v817 = vsel %vm794, %v773, 0
      %v820 = vsel %vm794, %v774, 0
      %v823 = vsel %vm794, %v775, 0
      %v826 = vsel %vm794, %v776, 0
      %v829 = vsel %vm794, %v777, 0
      %v832 = vsel %vm794, %v778, 0
      %v835 = vsel %vm794, %v779, 0
      %v838 = vsel %vm794, %v780, 0
      %v841 = vsel %vm794, %v781, 0
      %843 = vmatpush.msra.mxu0 0.0
      %844 = vmatpush.msra.mxu0 0.0
      %845 = vmatpush.msra.mxu0 0.0
      %846 = vmatpush.msra.mxu0 0.0
      %847 = vmatpush.msra.mxu0 0.0
      %848 = vmatpush.msra.mxu0 0.0
      %849 = vmatpush.msra.mxu0 0.0
      %850 = vmatpush.msra.mxu0 0.0
      %851 = vmatpush.msra.mxu0 %v789
      %852 = vmatpush.msra.mxu0 %v788
      %853 = vmatpush.msra.mxu0 %v787
      %854 = vmatpush.msra.mxu0 %v786
      %855 = vmatpush.msra.mxu0 %v785
      %856 = vmatpush.msra.mxu0 %v784
      %857 = vmatpush.msra.mxu0 %v783
      %858 = vmatpush.msra.mxu0 %v782
      %859 = vmatmul.f32.gmra.mxu0 %v796
      %v860 = vpop.f32.mrf.mxu0
      %v861 = vadd.f32 %v792, %v860
      %862 = vmatmul.f32.gmra.mxu0 %v799
      %v863 = vpop.f32.mrf.mxu0
      %v864 = vadd.f32 %v792, %v863
      %865 = vmatmul.f32.gmra.mxu0 %v802
      %v866 = vpop.f32.mrf.mxu0
      %v867 = vadd.f32 %v792, %v866
      %868 = vmatmul.f32.gmra.mxu0 %v805
      %v869 = vpop.f32.mrf.mxu0
      %v870 = vadd.f32 %v792, %v869
      %871 = vmatmul.f32.gmra.mxu0 %v808
      %v872 = vpop.f32.mrf.mxu0
      %v873 = vadd.f32 %v792, %v872
      %874 = vmatmul.f32.gmra.mxu0 %v811
      %v875 = vpop.f32.mrf.mxu0
      %v876 = vadd.f32 %v792, %v875
      %877 = vmatmul.f32.gmra.mxu0 %v814
      %v878 = vpop.f32.mrf.mxu0
      %v879 = vadd.f32 %v792, %v878
      %880 = vmatmul.f32.gmra.mxu0 %v817
      %v881 = vpop.f32.mrf.mxu0
      %v882 = vadd.f32 %v792, %v881
      %883 = vmatmul.f32.gmra.mxu0 %v820
      %v884 = vpop.f32.mrf.mxu0
      %v885 = vadd.f32 %v792, %v884
      %886 = vmatmul.f32.gmra.mxu0 %v823
      %v887 = vpop.f32.mrf.mxu0
      %v888 = vadd.f32 %v792, %v887
      %889 = vmatmul.f32.gmra.mxu0 %v826
      %v890 = vpop.f32.mrf.mxu0
      %v891 = vadd.f32 %v792, %v890
      %892 = vmatmul.f32.gmra.mxu0 %v829
      %v893 = vpop.f32.mrf.mxu0
      %v894 = vadd.f32 %v792, %v893
      %895 = vmatmul.f32.gmra.mxu0 %v832
      %v896 = vpop.f32.mrf.mxu0
      %v897 = vadd.f32 %v792, %v896
      %898 = vmatmul.f32.gmra.mxu0 %v835
      %v899 = vpop.f32.mrf.mxu0
      %v900 = vadd.f32 %v792, %v899
      %901 = vmatmul.f32.gmra.mxu0 %v838
      %v902 = vpop.f32.mrf.mxu0
      %v903 = vadd.f32 %v792, %v902
      %904 = vmatmul.f32.gmra.mxu0 %v841
      %v905 = vpop.f32.mrf.mxu0
      %v906 = vadd.f32 %v792, %v905
      %907 = vdwg.mxu0
      %908 = vst.msk [vmem:[%s226] sm:$0xff] %vm252, %v861
      %909 = vst.msk [vmem:[%s226 + $0x8] sm:$0xff] %vm252, %v864
      %910 = vst.msk [vmem:[%s226 + $0x10] sm:$0xff] %vm252, %v867
      %911 = vst.msk [vmem:[%s226 + $0x18] sm:$0xff] %vm252, %v870
      %912 = vst.msk [vmem:[%s226 + $0x20] sm:$0xff] %vm252, %v873
      %913 = vst.msk [vmem:[%s226 + $0x28] sm:$0xff] %vm252, %v876
      %914 = vst.msk [vmem:[%s226 + $0x30] sm:$0xff] %vm252, %v879
      %915 = vst.msk [vmem:[%s226 + $0x38] sm:$0xff] %vm252, %v882
      %916 = vst.msk [vmem:[%s226 + $0x40] sm:$0xff] %vm252, %v885
      %917 = vst.msk [vmem:[%s226 + $0x48] sm:$0xff] %vm252, %v888
      %918 = vst.msk [vmem:[%s226 + $0x50] sm:$0xff] %vm252, %v891
      %919 = vst.msk [vmem:[%s226 + $0x58] sm:$0xff] %vm252, %v894
      %920 = vst.msk [vmem:[%s226 + $0x60] sm:$0xff] %vm252, %v897
      %921 = vst.msk [vmem:[%s226 + $0x68] sm:$0xff] %vm252, %v900
      %922 = vst.msk [vmem:[%s226 + $0x70] sm:$0xff] %vm252, %v903
      %923 = vst.msk [vmem:[%s226 + $0x78] sm:$0xff] %vm252, %v906
      %s924 = smul.u32 16, %s16
      %p925 = scmp.lt.s32.totalorder %s924, 31
      %s926 = scalar_select %p925, %s924, 31
      %s927 = smul.addr %s926, 8
      %s928 = scalar_lea.vmem %s5, %s927
      // Predicated region
      $region41: #{_mlp_impl.1} parent=39 // pred_check
        %p929 = pneg %p144
      $region42: #{_mlp_impl.1} parent=39 // pred_check_branch
        %931 = sbr.rel (%p929) target = $region44
      $region43: #{_mlp_impl.1} parent=39 // pred_region
        %s932 = smul.u32 16, %s16
      $region44: #{_mlp_impl.1} parent=39 // pred_fallthru
        _
    $region40: #{_mlp_impl.1} parent=5 // pred_fallthru
      _
    %p933 = scmp.le.s32.totalorder 2, %s11
    // Predicated region
    $region45: #{_mlp_impl.1} parent=5 // pred_check
      %p934 = pneg %p933
    $region46: #{_mlp_impl.1} parent=5 // pred_check_branch
      %936 = sbr.rel (%p934) target = $region48
    $region47: #{_mlp_impl.1} parent=5 // pred_region
      %s937 = ssub.s32 %s11, 2
      // Predicated region
      $region49: #{_mlp_impl.1} parent=47 // pred_check
        %p938 = pneg %p150
      $region50: #{_mlp_impl.1} parent=47 // pred_check_branch
        %940 = sbr.rel (%p938) target = $region52
      $region51: #{_mlp_impl.1} parent=47 // pred_region
        %s941 = smul.u32 16, %s17
        %p942 = scmp.lt.s32.totalorder %s941, 31
        %s943 = scalar_select %p942, %s941, 31
        %s944 = smul.addr %s943, 8
        %s945 = scalar_lea.vmem %s5, %s944
      $region52: #{_mlp_impl.1} parent=47 // pred_fallthru
        _
    $region48: #{_mlp_impl.1} parent=5 // pred_fallthru
      _
  $region6: #{_mlp_impl.1} parent=0 // loop_footer
    %s15 = sadd.s32 1, %s11
  $region7: #{_mlp_impl.1} parent=0 // loop_footer_branch
    %10 = sbr.rel target = $region3
  $region8: #{_mlp_impl.1} parent=0 // loop_exit
    _

</llo_original>
